<compile_context>
chip_gen: v7x
topology: tpu7x:2x2x1
jax: 0.10.0
libtpu: 0.0.40
codegen_flags: <defaults>
</compile_context>

<pallas_src>
import functools

import jax
import jax.numpy as jnp
import numpy as np
from jax import lax
from jax.experimental import pallas as pl
from jax.experimental.pallas import tpu as pltpu

L = 1024   # instance feature dim (fixed by the module)
D = 512    # attention hidden dim (fixed by the module)
K = 1      # number of attention heads (fixed by the module)


def _attention_kernel(x_ref, w1_ref, b1_ref, w2r_ref, b2_ref, o_ref, *, c_valid):
    # x_ref:   (B, C, L) f32   B bags per grid step (C padded to a multiple of 8)
    # w1_ref:  (L, D)    bf16  first Linear weight (resident across the grid)
    # b1_ref:  (1, D)    f32
    # w2r_ref: (1, D)    f32   second Linear weight as a row (K == 1)
    # b2_ref:  (1, 1)    f32
    # o_ref:   (B, L)    f32   lane/sublane-dense bag embeddings
    B, C, Lb = x_ref.shape

    # Scoring-MLP hidden layer: one big MXU matmul over all B*C instances.
    # bf16 operands (MXU-native), f32 accumulation.
    xm = x_ref[...].reshape(B * C, Lb).astype(jnp.bfloat16)
    h = jnp.tanh(
        jnp.dot(xm, w1_ref[...], preferred_element_type=jnp.float32) + b1_ref[...]
    )                                                              # (B*C, D) f32

    # K == 1 score: VPU multiply + lane reduce (a 1-column MXU matmul is wasteful).
    s = jnp.sum(h.reshape(B, C, -1) * w2r_ref[...], axis=-1) + b2_ref[...]   # (B, C)

    # Mask instances added by the wrapper's pad of C up to a sublane multiple.
    if c_valid < C:
        col = lax.broadcasted_iota(jnp.int32, (B, C), 1)
        s = jnp.where(col < c_valid, s, -1e30)

    # Softmax over the C instances of each bag (lane axis; bags on sublanes).
    s = s - jnp.max(s, axis=-1, keepdims=True)
    e = jnp.exp(s)
    a = e / jnp.sum(e, axis=-1, keepdims=True)   # exact reciprocal: accuracy is free here

    # K == 1 bag embedding: M[b] = sum_c a[b, c] * x[b, c, :]  (VPU weighted sum),
    # computed in f32 from the original x and stored lane-dense as (B, L).
    o_ref[...] = jnp.sum(a[:, :, None] * x_ref[...], axis=1).astype(o_ref.dtype)


def _round_up(v, m):
    return ((v + m - 1) // m) * m


def attention_forward(x, w1, b1, w2, b2, *, bag_block=None):
    """x: (N, C, L) f32, w1: (L, D), b1: (D,), w2: (D, 1), b2: (1,) -> (N, 1, L)."""
    N, C, Lx = x.shape
    assert Lx == L and w1.shape == (L, D) and w2.shape == (D, K) and K == 1

    # Pad C up to a sublane multiple so the in-kernel (B, C, L) -> (B*C, L)
    # reshape is layout-free (f32 packs 8 rows per sublane group).  Padded
    # instances are masked to -inf before the softmax inside the kernel.
    Cp = _round_up(C, 8)
    if Cp != C:
        x = jnp.pad(x, ((0, 0), (0, Cp - C), (0, 0)))

    if bag_block is None:
        # ~2048 scoring-MLP rows (an 8 MiB f32 x slab) per grid step: fills the
        # MXU, amortizes per-step overhead, and double-buffered stays well
        # inside v7x's 64 MiB VMEM (v5e/v6e have 128 MiB).
        B = max(8, min(2048 // Cp, _round_up(N, 8)))
    else:
        B = max(8, int(bag_block))
    B = _round_up(B, 8)   # bags land on sublanes of the (B, L) output block
    n_blocks = (N + B - 1) // B
    # v7x megacore: prefer >= 2 grid steps so both TensorCores get work.
    if n_blocks == 1 and N > 8:
        B = _round_up((N + 1) // 2, 8)
        n_blocks = (N + B - 1) // B
    Np = n_blocks * B
    if Np != N:
        # Zero-pad whole bags; they softmax independently and are sliced off below.
        x = jnp.pad(x, ((0, Np - N), (0, 0), (0, 0)))

    w1_bf16 = w1.astype(jnp.bfloat16)                  # bf16 weights for the MXU
    b1_2d = b1.reshape(1, D).astype(jnp.float32)
    w2_row = w2.reshape(1, D).astype(jnp.float32)      # (D, K=1) -> row vector
    b2_2d = b2.reshape(1, K).astype(jnp.float32)

    kernel = functools.partial(_attention_kernel, c_valid=C)

    out = pl.pallas_call(
        kernel,
        out_shape=jax.ShapeDtypeStruct((Np, L), x.dtype),
        grid_spec=pltpu.PrefetchScalarGridSpec(
            num_scalar_prefetch=0,
            grid=(n_blocks,),
            in_specs=[
                pl.BlockSpec((B, Cp, L), lambda i: (i, 0, 0)),   # x: B bags / step
                pl.BlockSpec((L, D), lambda i: (0, 0)),          # W1 (resident, bf16, ~1 MiB)
                pl.BlockSpec((1, D), lambda i: (0, 0)),          # b1
                pl.BlockSpec((1, D), lambda i: (0, 0)),          # W2 row
                pl.BlockSpec((1, K), lambda i: (0, 0)),          # b2
            ],
            # Lane/sublane-dense output block (B, L): no 1->8 sublane padding,
            # no masked vst -> ~8x less HBM writeback than a (B, 1, L) block.
            out_specs=pl.BlockSpec((B, L), lambda i: (i, 0)),
        ),
        compiler_params=pltpu.CompilerParams(
            dimension_semantics=("parallel",),     # bags independent (v7x dual-TC)
            vmem_limit_bytes=48 * 1024 * 1024,     # fits v7x's 64 MiB part
        ),
    )(x, w1_bf16, b1_2d, w2_row, b2_2d)

    return out[:N].reshape(N, K, L)


def reference_forward(x, w1, b1, w2, b2):
    N, C, Lx = x.shape
    H = x.reshape(-1, Lx)                         # (N*C, L)
    A = jnp.tanh(H @ w1 + b1) @ w2 + b2           # (N*C, K)
    A = A.reshape(N, C, K)
    A = jax.nn.softmax(A, axis=1)
    A = jnp.transpose(A, (0, 2, 1))               # (N, K, C)
    return jnp.einsum("nkc,ncl->nkl", A, x)       # (N, K, L)


if __name__ == "__main__":
    key = jax.random.PRNGKey(0)
    k_x, k_x2, k_w1, k_b1, k_w2, k_b2 = jax.random.split(key, 6)

    # deterministic PyTorch-Linear-style init: U(-1/sqrt(fan_in), 1/sqrt(fan_in))
    lim1 = 1.0 / np.sqrt(L)
    w1 = jax.random.uniform(k_w1, (L, D), jnp.float32, -lim1, lim1)
    b1 = jax.random.uniform(k_b1, (D,), jnp.float32, -lim1, lim1)
    lim2 = 1.0 / np.sqrt(D)
    w2 = jax.random.uniform(k_w2, (D, K), jnp.float32, -lim2, lim2)
    b2 = jax.random.uniform(k_b2, (K,), jnp.float32, -lim2, lim2)

    # Tolerance: the scoring matmul runs with bf16 operands on the MXU (f32
    # accumulation).  The ~1e-3-relative perturbation of the attention logits
    # shifts the softmax weights by O(1e-3), so the pooled output differs from
    # the all-f32 reference by at most a few 1e-3 absolute.  The final weighted
    # sum itself stays in f32, and the softmax reciprocal is exact.
    tol = dict(rtol=2e-2, atol=3e-3)

    # Case 1: C a sublane multiple, N smaller than the bag block (bag padding path).
    N, C = 2, 8
    x = jax.random.normal(k_x, (N, C, L), dtype=jnp.float32)
    m = jax.block_until_ready(attention_forward(x, w1, b1, w2, b2))
    m_ref = jax.block_until_ready(reference_forward(x, w1, b1, w2, b2))
    np.testing.assert_allclose(np.asarray(m), np.asarray(m_ref), **tol)

    # Case 2: C not a sublane multiple (exercises the instance mask) and odd N.
    N2, C2 = 3, 5
    x2 = jax.random.normal(k_x2, (N2, C2, L), dtype=jnp.float32)
    m2 = jax.block_until_ready(attention_forward(x2, w1, b1, w2, b2))
    m2_ref = jax.block_until_ready(reference_forward(x2, w1, b1, w2, b2))
    np.testing.assert_allclose(np.asarray(m2), np.asarray(m2_ref), **tol)

    print("KERNEL_OK")
</pallas_src>

<mosaic_0001>
module attributes {stable_mosaic.version = 11 : i64} {
  func.func @_attention_kernel(%arg0: i32, %arg1: memref<8x8x1024xf32, #tpu.memory_space<vmem>>, %arg2: memref<1024x512xbf16, #tpu.memory_space<vmem>>, %arg3: memref<1x512xf32, #tpu.memory_space<vmem>>, %arg4: memref<1x512xf32, #tpu.memory_space<vmem>>, %arg5: memref<1x1xf32, #tpu.memory_space<vmem>>, %arg6: memref<8x1024xf32, #tpu.memory_space<vmem>>) attributes {dimension_semantics = [#tpu.dimension_semantics<parallel>], iteration_bounds = array<i64: 1>, scalar_prefetch = 0 : i64, scratch_operands = 0 : i64, tpu.core_type = #tpu.core_type<tc>, window_params = [{transform_indices = @transform_0, window_bounds = array<i64: 8, 8, 1024>}, {pipeline_mode = #tpu.pipeline_mode<synchronous>, transform_indices = @transform_1, window_bounds = array<i64: 1024, 512>}, {pipeline_mode = #tpu.pipeline_mode<synchronous>, transform_indices = @transform_2, window_bounds = array<i64: 1, 512>}, {pipeline_mode = #tpu.pipeline_mode<synchronous>, transform_indices = @transform_3, window_bounds = array<i64: 1, 512>}, {pipeline_mode = #tpu.pipeline_mode<synchronous>, transform_indices = @transform_4, window_bounds = array<i64: 1, 1>}, {transform_indices = @transform_5, window_bounds = array<i64: 8, 1024>}]} {
    %c0 = arith.constant 0 : index
    %c0_0 = arith.constant 0 : index
    %c0_1 = arith.constant 0 : index
    %0 = vector.load %arg1[%c0, %c0_0, %c0_1] : memref<8x8x1024xf32, #tpu.memory_space<vmem>>, vector<8x8x1024xf32>
    %1 = vector.shape_cast %0 : vector<8x8x1024xf32> to vector<64x1024xf32>
    %2 = arith.truncf %1 : vector<64x1024xf32> to vector<64x1024xbf16>
    %c0_2 = arith.constant 0 : index
    %c0_3 = arith.constant 0 : index
    %3 = vector.load %arg2[%c0_2, %c0_3] : memref<1024x512xbf16, #tpu.memory_space<vmem>>, vector<1024x512xbf16>
    %cst = arith.constant dense<0.000000e+00> : vector<64x512xf32>
    %4 = tpu.matmul %2, %3, %cst {dimension_numbers = #tpu.dot_dimension_numbers<[1], [0], [0], [1], [0, 0, 1, 1], [], []>} : vector<64x1024xbf16>, vector<1024x512xbf16>, vector<64x512xf32> -> vector<64x512xf32>
    %c0_4 = arith.constant 0 : index
    %c0_5 = arith.constant 0 : index
    %5 = vector.load %arg3[%c0_4, %c0_5] : memref<1x512xf32, #tpu.memory_space<vmem>>, vector<1x512xf32>
    %6 = vector.broadcast %5 : vector<1x512xf32> to vector<64x512xf32>
    %7 = arith.addf %4, %6 : vector<64x512xf32>
    %8 = math.tanh %7 : vector<64x512xf32>
    %9 = vector.shape_cast %8 : vector<64x512xf32> to vector<8x8x512xf32>
    %c0_6 = arith.constant 0 : index
    %c0_7 = arith.constant 0 : index
    %10 = vector.load %arg4[%c0_6, %c0_7] : memref<1x512xf32, #tpu.memory_space<vmem>>, vector<1x512xf32>
    %11 = vector.shape_cast %10 : vector<1x512xf32> to vector<1x1x512xf32>
    %12 = vector.broadcast %11 : vector<1x1x512xf32> to vector<8x8x512xf32>
    %13 = arith.mulf %9, %12 : vector<8x8x512xf32>
    %cst_8 = arith.constant dense<0.000000e+00> : vector<8x8xf32>
    %14 = vector.multi_reduction <add>, %13, %cst_8 [2] : vector<8x8x512xf32> to vector<8x8xf32>
    %c0_9 = arith.constant 0 : index
    %c0_10 = arith.constant 0 : index
    %15 = vector.load %arg5[%c0_9, %c0_10] : memref<1x1xf32, #tpu.memory_space<vmem>>, vector<1x1xf32>
    %16 = vector.broadcast %15 : vector<1x1xf32> to vector<8x8xf32>
    %17 = arith.addf %14, %16 : vector<8x8xf32>
    %cst_11 = arith.constant dense<0xFF800000> : vector<8xf32>
    %18 = vector.multi_reduction <maximumf>, %17, %cst_11 [1] : vector<8x8xf32> to vector<8xf32>
    %19 = vector.shape_cast %18 : vector<8xf32> to vector<8x1xf32>
    %20 = vector.broadcast %19 : vector<8x1xf32> to vector<8x8xf32>
    %21 = arith.subf %17, %20 : vector<8x8xf32>
    %22 = math.exp %21 : vector<8x8xf32>
    %cst_12 = arith.constant dense<0.000000e+00> : vector<8xf32>
    %23 = vector.multi_reduction <add>, %22, %cst_12 [1] : vector<8x8xf32> to vector<8xf32>
    %24 = vector.shape_cast %23 : vector<8xf32> to vector<8x1xf32>
    %25 = vector.broadcast %24 : vector<8x1xf32> to vector<8x8xf32>
    %26 = arith.divf %22, %25 : vector<8x8xf32>
    %27 = vector.shape_cast %26 : vector<8x8xf32> to vector<8x8x1xf32>
    %c0_13 = arith.constant 0 : index
    %c0_14 = arith.constant 0 : index
    %c0_15 = arith.constant 0 : index
    %28 = vector.load %arg1[%c0_13, %c0_14, %c0_15] : memref<8x8x1024xf32, #tpu.memory_space<vmem>>, vector<8x8x1024xf32>
    %29 = vector.broadcast %27 : vector<8x8x1xf32> to vector<8x8x1024xf32>
    %30 = arith.mulf %29, %28 : vector<8x8x1024xf32>
    %cst_16 = arith.constant dense<0.000000e+00> : vector<8x1024xf32>
    %31 = vector.multi_reduction <add>, %30, %cst_16 [1] : vector<8x8x1024xf32> to vector<8x1024xf32>
    %c0_17 = arith.constant 0 : index
    %c0_18 = arith.constant 0 : index
    %32 = vector.load %arg6[%c0_17, %c0_18] : memref<8x1024xf32, #tpu.memory_space<vmem>>, vector<8x1024xf32>
    tpu.vector_store %arg6[%c0_17, %c0_18], %31 {strides = array<i32>} : memref<8x1024xf32, #tpu.memory_space<vmem>>, vector<8x1024xf32>,
    return
  }
  func.func @transform_0(%arg0: i32) -> (i32, i32, i32) {
    %c0_i32 = arith.constant 0 : i32
    %c0_i32_0 = arith.constant 0 : i32
    %c0_i32_1 = arith.constant 0 : i32
    return %arg0, %c0_i32, %c0_i32_0 : i32, i32, i32
  }
  func.func @transform_1(%arg0: i32) -> (i32, i32) {
    %c0_i32 = arith.constant 0 : i32
    %c0_i32_0 = arith.constant 0 : i32
    %c0_i32_1 = arith.constant 0 : i32
    return %c0_i32, %c0_i32_0 : i32, i32
  }
  func.func @transform_2(%arg0: i32) -> (i32, i32) {
    %c0_i32 = arith.constant 0 : i32
    %c0_i32_0 = arith.constant 0 : i32
    %c0_i32_1 = arith.constant 0 : i32
    return %c0_i32, %c0_i32_0 : i32, i32
  }
  func.func @transform_3(%arg0: i32) -> (i32, i32) {
    %c0_i32 = arith.constant 0 : i32
    %c0_i32_0 = arith.constant 0 : i32
    %c0_i32_1 = arith.constant 0 : i32
    return %c0_i32, %c0_i32_0 : i32, i32
  }
  func.func @transform_4(%arg0: i32) -> (i32, i32) {
    %c0_i32 = arith.constant 0 : i32
    %c0_i32_0 = arith.constant 0 : i32
    %c0_i32_1 = arith.constant 0 : i32
    return %c0_i32, %c0_i32_0 : i32, i32
  }
  func.func @transform_5(%arg0: i32) -> (i32, i32) {
    %c0_i32 = arith.constant 0 : i32
    %c0_i32_0 = arith.constant 0 : i32
    return %arg0, %c0_i32 : i32, i32
  }
}

</mosaic_0001>

<llo_original>
// kernel: tpu_custom_call.1
$region0: #{tpu_custom_call.1}
  #allocation0 [shape = 'u32[]', space=smem, size = 0x4, offset = 0x4, fixed_abs, tag = 'smem constant byte address 0x4 - core index']
  #allocation1 [shape = 'u32[144,128]{1,0:T(1,128)}', space=vmem, size = 0x12000, scoped, tag = 'internal scratch']
  #allocation2 [shape = 'f32[1,1]{1,0:T(1,128)S(1)}', space=vmem, size = 0x200, scoped, tag = 'scoped memory for tpu_custom_call.1']
  %s0 = inlined_call_operand.hbm [shape: f32[8,8,1024], index: 0, kind: input, shape index: {}]
  %s1 = inlined_call_operand.hbm [shape: bf16[1024,512], index: 1, kind: input, shape index: {}]
  %s2 = inlined_call_operand.vmem [shape: f32[1,512], index: 2, kind: input, shape index: {}]
  %s3 = inlined_call_operand.vmem [shape: f32[1,512], index: 3, kind: input, shape index: {}]
  %s4 = inlined_call_operand.<no memory space> [shape: f32[1,1], index: 4, kind: input, shape index: {}]
  %s5 = inlined_call_operand.hbm [shape: f32[8,1024], index: 5, kind: output, shape index: {}]
  %s6 = sld [smem:[#allocation0]]
  $region38: #{tpu_custom_call.1} parent=0
    _
  %s8 = ssub.s32 1, %s6
  %s9 = scalar_select 0, %s8, %s6
  %v10 = vstv %s4
  %11 = vst [vmem:[#allocation2] sm:$0x1] %v10
  $region1: #{tpu_custom_call.1} parent=0
    #allocation3 [shape = 'u8[262144]{0}', space=vmem, size = 0x40000, scoped, tag = 'input window, operand 0, single buffered']
    #allocation4 [shape = 's32[1]{0}', space=sflag, size = 0x4, scoped, tag = 'scoped memory for tpu_custom_call.1']
    #allocation5 [shape = 's32[1]{0}', space=sflag, size = 0x4, scoped, tag = 'scoped memory for tpu_custom_call.1']
    #allocation6 [shape = 'u8[1048576]{0}', space=vmem, size = 0x100000, scoped, tag = 'input window, operand 1, single buffered']
    #allocation7 [shape = 's32[1]{0}', space=sflag, size = 0x4, scoped, tag = 'scoped memory for tpu_custom_call.1']
    #allocation8 [shape = 'u8[32768]{0}', space=vmem, size = 0x8000, scoped, tag = 'output window, operand 0, single buffered']
    %12 = vsyncpa [#allocation4], 0
    %13 = vsyncpa [#allocation7], 0
    %14 = vsyncpa [#allocation5], 0
    // Predicated region
    $region2: #{tpu_custom_call.1} parent=1 // pred_check
      _
    $region3: #{tpu_custom_call.1} parent=1 // pred_check_branch
      %16 = sbr.rel (0) target = $region5
    $region4: #{tpu_custom_call.1} parent=1 // pred_region
      %s18 = ssub.s32 8192, 8192
      %19 = vsyncadd [#allocation4], %s18
      %s20 = sshll.u32 [#allocation3], 4
      %s21 = int_to_ptr.vmem [resolvable:$true] %s20
      %26 = dma.hbm_to_vmem [thread:$0]  %s0, 8192, %s21, [#allocation4], 1024, 1024, 64
    $region5: #{tpu_custom_call.1} parent=1 // pred_fallthru
      _
    // Predicated region
    $region6: #{tpu_custom_call.1} parent=1 // pred_check
      _
    $region7: #{tpu_custom_call.1} parent=1 // pred_check_branch
      %28 = sbr.rel (0) target = $region9
    $region8: #{tpu_custom_call.1} parent=1 // pred_region
      %s30 = ssub.s32 32768, 32768
      %31 = vsyncadd [#allocation7], %s30
      %s32 = sshll.u32 [#allocation6], 4
      %s33 = int_to_ptr.vmem [resolvable:$true] %s32
      %38 = dma.hbm_to_vmem [thread:$0]  %s1, 32768, %s33, [#allocation7], 256, 256, 16
    $region9: #{tpu_custom_call.1} parent=1 // pred_fallthru
      _
    // Predicated region
    $region10: #{tpu_custom_call.1} parent=1 // pred_check
      _
    $region11: #{tpu_custom_call.1} parent=1 // pred_check_branch
      %40 = sbr.rel (0) target = $region13
    $region12: #{tpu_custom_call.1} parent=1 // pred_region
      _
    $region13: #{tpu_custom_call.1} parent=1 // pred_fallthru
      _
    // Predicated region
    $region14: #{tpu_custom_call.1} parent=1 // pred_check
      _
    $region15: #{tpu_custom_call.1} parent=1 // pred_check_branch
      %42 = sbr.rel (0) target = $region17
    $region16: #{tpu_custom_call.1} parent=1 // pred_region
      _
    $region17: #{tpu_custom_call.1} parent=1 // pred_fallthru
      _
    // Predicated region
    $region18: #{tpu_custom_call.1} parent=1 // pred_check
      _
    $region19: #{tpu_custom_call.1} parent=1 // pred_check_branch
      %44 = sbr.rel (0) target = $region21
    $region20: #{tpu_custom_call.1} parent=1 // pred_region
      _
    $region21: #{tpu_custom_call.1} parent=1 // pred_fallthru
      _
    // Predicated region
    $region22: #{tpu_custom_call.1} parent=1 // pred_check
      _
    $region23: #{tpu_custom_call.1} parent=1 // pred_check_branch
      %46 = sbr.rel (0) target = $region25
    $region24: #{tpu_custom_call.1} parent=1 // pred_region
      %47 = dma.done [#allocation4], 8192
    $region25: #{tpu_custom_call.1} parent=1 // pred_fallthru
      _
    // Predicated region
    $region26: #{tpu_custom_call.1} parent=1 // pred_check
      _
    $region27: #{tpu_custom_call.1} parent=1 // pred_check_branch
      %49 = sbr.rel (0) target = $region29
    $region28: #{tpu_custom_call.1} parent=1 // pred_region
      %50 = dma.done [#allocation7], 32768
    $region29: #{tpu_custom_call.1} parent=1 // pred_fallthru
      _
    %v51 = vld [vmem:[#allocation3] sm:$0xff]
    %v52 = vld [vmem:[#allocation3 + $0x8] sm:$0xff]
    %v53 = vld [vmem:[#allocation3 + $0x10] sm:$0xff]
    %v54 = vld [vmem:[#allocation3 + $0x18] sm:$0xff]
    %v55 = vld [vmem:[#allocation3 + $0x20] sm:$0xff]
    %v56 = vld [vmem:[#allocation3 + $0x28] sm:$0xff]
    %v57 = vld [vmem:[#allocation3 + $0x30] sm:$0xff]
    %v58 = vld [vmem:[#allocation3 + $0x38] sm:$0xff]
    %v59 = vld [vmem:[#allocation3 + $0x40] sm:$0xff]
    %v60 = vld [vmem:[#allocation3 + $0x48] sm:$0xff]
    %v61 = vld [vmem:[#allocation3 + $0x50] sm:$0xff]
    %v62 = vld [vmem:[#allocation3 + $0x58] sm:$0xff]
    %v63 = vld [vmem:[#allocation3 + $0x60] sm:$0xff]
    %v64 = vld [vmem:[#allocation3 + $0x68] sm:$0xff]
    %v65 = vld [vmem:[#allocation3 + $0x70] sm:$0xff]
    %v66 = vld [vmem:[#allocation3 + $0x78] sm:$0xff]
    %v67 = vld [vmem:[#allocation3 + $0x80] sm:$0xff]
    %v68 = vld [vmem:[#allocation3 + $0x88] sm:$0xff]
    %v69 = vld [vmem:[#allocation3 + $0x90] sm:$0xff]
    %v70 = vld [vmem:[#allocation3 + $0x98] sm:$0xff]
    %v71 = vld [vmem:[#allocation3 + $0xa0] sm:$0xff]
    %v72 = vld [vmem:[#allocation3 + $0xa8] sm:$0xff]
    %v73 = vld [vmem:[#allocation3 + $0xb0] sm:$0xff]
    %v74 = vld [vmem:[#allocation3 + $0xb8] sm:$0xff]
    %v75 = vld [vmem:[#allocation3 + $0xc0] sm:$0xff]
    %v76 = vld [vmem:[#allocation3 + $0xc8] sm:$0xff]
    %v77 = vld [vmem:[#allocation3 + $0xd0] sm:$0xff]
    %v78 = vld [vmem:[#allocation3 + $0xd8] sm:$0xff]
    %v79 = vld [vmem:[#allocation3 + $0xe0] sm:$0xff]
    %v80 = vld [vmem:[#allocation3 + $0xe8] sm:$0xff]
    %v81 = vld [vmem:[#allocation3 + $0xf0] sm:$0xff]
    %v82 = vld [vmem:[#allocation3 + $0xf8] sm:$0xff]
    %v83 = vld [vmem:[#allocation3 + $0x100] sm:$0xff]
    %v84 = vld [vmem:[#allocation3 + $0x108] sm:$0xff]
    %v85 = vld [vmem:[#allocation3 + $0x110] sm:$0xff]
    %v86 = vld [vmem:[#allocation3 + $0x118] sm:$0xff]
    %v87 = vld [vmem:[#allocation3 + $0x120] sm:$0xff]
    %v88 = vld [vmem:[#allocation3 + $0x128] sm:$0xff]
    %v89 = vld [vmem:[#allocation3 + $0x130] sm:$0xff]
    %v90 = vld [vmem:[#allocation3 + $0x138] sm:$0xff]
    %v91 = vld [vmem:[#allocation3 + $0x140] sm:$0xff]
    %v92 = vld [vmem:[#allocation3 + $0x148] sm:$0xff]
    %v93 = vld [vmem:[#allocation3 + $0x150] sm:$0xff]
    %v94 = vld [vmem:[#allocation3 + $0x158] sm:$0xff]
    %v95 = vld [vmem:[#allocation3 + $0x160] sm:$0xff]
    %v96 = vld [vmem:[#allocation3 + $0x168] sm:$0xff]
    %v97 = vld [vmem:[#allocation3 + $0x170] sm:$0xff]
    %v98 = vld [vmem:[#allocation3 + $0x178] sm:$0xff]
    %v99 = vld [vmem:[#allocation3 + $0x180] sm:$0xff]
    %v100 = vld [vmem:[#allocation3 + $0x188] sm:$0xff]
    %v101 = vld [vmem:[#allocation3 + $0x190] sm:$0xff]
    %v102 = vld [vmem:[#allocation3 + $0x198] sm:$0xff]
    %v103 = vld [vmem:[#allocation3 + $0x1a0] sm:$0xff]
    %v104 = vld [vmem:[#allocation3 + $0x1a8] sm:$0xff]
    %v105 = vld [vmem:[#allocation3 + $0x1b0] sm:$0xff]
    %v106 = vld [vmem:[#allocation3 + $0x1b8] sm:$0xff]
    %v107 = vld [vmem:[#allocation3 + $0x1c0] sm:$0xff]
    %v108 = vld [vmem:[#allocation3 + $0x1c8] sm:$0xff]
    %v109 = vld [vmem:[#allocation3 + $0x1d0] sm:$0xff]
    %v110 = vld [vmem:[#allocation3 + $0x1d8] sm:$0xff]
    %v111 = vld [vmem:[#allocation3 + $0x1e0] sm:$0xff]
    %v112 = vld [vmem:[#allocation3 + $0x1e8] sm:$0xff]
    %v113 = vld [vmem:[#allocation3 + $0x1f0] sm:$0xff]
    %v114 = vld [vmem:[#allocation3 + $0x1f8] sm:$0xff]
    %v115 = vpack.c.bf16 %v59, %v51
    %v116 = vpack.c.bf16 %v60, %v52
    %v117 = vpack.c.bf16 %v61, %v53
    %v118 = vpack.c.bf16 %v62, %v54
    %v119 = vpack.c.bf16 %v63, %v55
    %v120 = vpack.c.bf16 %v64, %v56
    %v121 = vpack.c.bf16 %v65, %v57
    %v122 = vpack.c.bf16 %v66, %v58
    %v123 = vpack.c.bf16 %v75, %v67
    %v124 = vpack.c.bf16 %v76, %v68
    %v125 = vpack.c.bf16 %v77, %v69
    %v126 = vpack.c.bf16 %v78, %v70
    %v127 = vpack.c.bf16 %v79, %v71
    %v128 = vpack.c.bf16 %v80, %v72
    %v129 = vpack.c.bf16 %v81, %v73
    %v130 = vpack.c.bf16 %v82, %v74
    %v131 = vpack.c.bf16 %v91, %v83
    %v132 = vpack.c.bf16 %v92, %v84
    %v133 = vpack.c.bf16 %v93, %v85
    %v134 = vpack.c.bf16 %v94, %v86
    %v135 = vpack.c.bf16 %v95, %v87
    %v136 = vpack.c.bf16 %v96, %v88
    %v137 = vpack.c.bf16 %v97, %v89
    %v138 = vpack.c.bf16 %v98, %v90
    %v139 = vpack.c.bf16 %v107, %v99
    %v140 = vpack.c.bf16 %v108, %v100
    %v141 = vpack.c.bf16 %v109, %v101
    %v142 = vpack.c.bf16 %v110, %v102
    %v143 = vpack.c.bf16 %v111, %v103
    %v144 = vpack.c.bf16 %v112, %v104
    %v145 = vpack.c.bf16 %v113, %v105
    %v146 = vpack.c.bf16 %v114, %v106
    %v147 = vld [vmem:[#allocation6] sm:$0xff]
    %v148 = vld [vmem:[#allocation6 + $0x8] sm:$0xff]
    %v149 = vld [vmem:[#allocation6 + $0x10] sm:$0xff]
    %v150 = vld [vmem:[#allocation6 + $0x18] sm:$0xff]
    %v151 = vld [vmem:[#allocation6 + $0x20] sm:$0xff]
    %v152 = vld [vmem:[#allocation6 + $0x28] sm:$0xff]
    %v153 = vld [vmem:[#allocation6 + $0x30] sm:$0xff]
    %v154 = vld [vmem:[#allocation6 + $0x38] sm:$0xff]
    %v155 = vld [vmem:[#allocation6 + $0x40] sm:$0xff]
    %v156 = vld [vmem:[#allocation6 + $0x48] sm:$0xff]
    %v157 = vld [vmem:[#allocation6 + $0x50] sm:$0xff]
    %v158 = vld [vmem:[#allocation6 + $0x58] sm:$0xff]
    %v159 = vld [vmem:[#allocation6 + $0x60] sm:$0xff]
    %v160 = vld [vmem:[#allocation6 + $0x68] sm:$0xff]
    %v161 = vld [vmem:[#allocation6 + $0x70] sm:$0xff]
    %v162 = vld [vmem:[#allocation6 + $0x78] sm:$0xff]
    %v163 = vld [vmem:[#allocation6 + $0x80] sm:$0xff]
    %v164 = vld [vmem:[#allocation6 + $0x88] sm:$0xff]
    %v165 = vld [vmem:[#allocation6 + $0x90] sm:$0xff]
    %v166 = vld [vmem:[#allocation6 + $0x98] sm:$0xff]
    %v167 = vld [vmem:[#allocation6 + $0xa0] sm:$0xff]
    %v168 = vld [vmem:[#allocation6 + $0xa8] sm:$0xff]
    %v169 = vld [vmem:[#allocation6 + $0xb0] sm:$0xff]
    %v170 = vld [vmem:[#allocation6 + $0xb8] sm:$0xff]
    %v171 = vld [vmem:[#allocation6 + $0xc0] sm:$0xff]
    %v172 = vld [vmem:[#allocation6 + $0xc8] sm:$0xff]
    %v173 = vld [vmem:[#allocation6 + $0xd0] sm:$0xff]
    %v174 = vld [vmem:[#allocation6 + $0xd8] sm:$0xff]
    %v175 = vld [vmem:[#allocation6 + $0xe0] sm:$0xff]
    %v176 = vld [vmem:[#allocation6 + $0xe8] sm:$0xff]
    %v177 = vld [vmem:[#allocation6 + $0xf0] sm:$0xff]
    %v178 = vld [vmem:[#allocation6 + $0xf8] sm:$0xff]
    %v179 = vld [vmem:[#allocation6 + $0x100] sm:$0xff]
    %v180 = vld [vmem:[#allocation6 + $0x108] sm:$0xff]
    %v181 = vld [vmem:[#allocation6 + $0x110] sm:$0xff]
    %v182 = vld [vmem:[#allocation6 + $0x118] sm:$0xff]
    %v183 = vld [vmem:[#allocation6 + $0x120] sm:$0xff]
    %v184 = vld [vmem:[#allocation6 + $0x128] sm:$0xff]
    %v185 = vld [vmem:[#allocation6 + $0x130] sm:$0xff]
    %v186 = vld [vmem:[#allocation6 + $0x138] sm:$0xff]
    %v187 = vld [vmem:[#allocation6 + $0x140] sm:$0xff]
    %v188 = vld [vmem:[#allocation6 + $0x148] sm:$0xff]
    %v189 = vld [vmem:[#allocation6 + $0x150] sm:$0xff]
    %v190 = vld [vmem:[#allocation6 + $0x158] sm:$0xff]
    %v191 = vld [vmem:[#allocation6 + $0x160] sm:$0xff]
    %v192 = vld [vmem:[#allocation6 + $0x168] sm:$0xff]
    %v193 = vld [vmem:[#allocation6 + $0x170] sm:$0xff]
    %v194 = vld [vmem:[#allocation6 + $0x178] sm:$0xff]
    %v195 = vld [vmem:[#allocation6 + $0x180] sm:$0xff]
    %v196 = vld [vmem:[#allocation6 + $0x188] sm:$0xff]
    %v197 = vld [vmem:[#allocation6 + $0x190] sm:$0xff]
    %v198 = vld [vmem:[#allocation6 + $0x198] sm:$0xff]
    %v199 = vld [vmem:[#allocation6 + $0x1a0] sm:$0xff]
    %v200 = vld [vmem:[#allocation6 + $0x1a8] sm:$0xff]
    %v201 = vld [vmem:[#allocation6 + $0x1b0] sm:$0xff]
    %v202 = vld [vmem:[#allocation6 + $0x1b8] sm:$0xff]
    %v203 = vld [vmem:[#allocation6 + $0x1c0] sm:$0xff]
    %v204 = vld [vmem:[#allocation6 + $0x1c8] sm:$0xff]
    %v205 = vld [vmem:[#allocation6 + $0x1d0] sm:$0xff]
    %v206 = vld [vmem:[#allocation6 + $0x1d8] sm:$0xff]
    %v207 = vld [vmem:[#allocation6 + $0x1e0] sm:$0xff]
    %v208 = vld [vmem:[#allocation6 + $0x1e8] sm:$0xff]
    %v209 = vld [vmem:[#allocation6 + $0x1f0] sm:$0xff]
    %v210 = vld [vmem:[#allocation6 + $0x1f8] sm:$0xff]
    %v211 = vld [vmem:[#allocation6 + $0x200] sm:$0xff]
    %v212 = vld [vmem:[#allocation6 + $0x208] sm:$0xff]
    %v213 = vld [vmem:[#allocation6 + $0x210] sm:$0xff]
    %v214 = vld [vmem:[#allocation6 + $0x218] sm:$0xff]
    %v215 = vld [vmem:[#allocation6 + $0x220] sm:$0xff]
    %v216 = vld [vmem:[#allocation6 + $0x228] sm:$0xff]
    %v217 = vld [vmem:[#allocation6 + $0x230] sm:$0xff]
    %v218 = vld [vmem:[#allocation6 + $0x238] sm:$0xff]
    %v219 = vld [vmem:[#allocation6 + $0x240] sm:$0xff]
    %v220 = vld [vmem:[#allocation6 + $0x248] sm:$0xff]
    %v221 = vld [vmem:[#allocation6 + $0x250] sm:$0xff]
    %v222 = vld [vmem:[#allocation6 + $0x258] sm:$0xff]
    %v223 = vld [vmem:[#allocation6 + $0x260] sm:$0xff]
    %v224 = vld [vmem:[#allocation6 + $0x268] sm:$0xff]
    %v225 = vld [vmem:[#allocation6 + $0x270] sm:$0xff]
    %v226 = vld [vmem:[#allocation6 + $0x278] sm:$0xff]
    %v227 = vld [vmem:[#allocation6 + $0x280] sm:$0xff]
    %v228 = vld [vmem:[#allocation6 + $0x288] sm:$0xff]
    %v229 = vld [vmem:[#allocation6 + $0x290] sm:$0xff]
    %v230 = vld [vmem:[#allocation6 + $0x298] sm:$0xff]
    %v231 = vld [vmem:[#allocation6 + $0x2a0] sm:$0xff]
    %v232 = vld [vmem:[#allocation6 + $0x2a8] sm:$0xff]
    %v233 = vld [vmem:[#allocation6 + $0x2b0] sm:$0xff]
    %v234 = vld [vmem:[#allocation6 + $0x2b8] sm:$0xff]
    %v235 = vld [vmem:[#allocation6 + $0x2c0] sm:$0xff]
    %v236 = vld [vmem:[#allocation6 + $0x2c8] sm:$0xff]
    %v237 = vld [vmem:[#allocation6 + $0x2d0] sm:$0xff]
    %v238 = vld [vmem:[#allocation6 + $0x2d8] sm:$0xff]
    %v239 = vld [vmem:[#allocation6 + $0x2e0] sm:$0xff]
    %v240 = vld [vmem:[#allocation6 + $0x2e8] sm:$0xff]
    %v241 = vld [vmem:[#allocation6 + $0x2f0] sm:$0xff]
    %v242 = vld [vmem:[#allocation6 + $0x2f8] sm:$0xff]
    %v243 = vld [vmem:[#allocation6 + $0x300] sm:$0xff]
    %v244 = vld [vmem:[#allocation6 + $0x308] sm:$0xff]
    %v245 = vld [vmem:[#allocation6 + $0x310] sm:$0xff]
    %v246 = vld [vmem:[#allocation6 + $0x318] sm:$0xff]
    %v247 = vld [vmem:[#allocation6 + $0x320] sm:$0xff]
    %v248 = vld [vmem:[#allocation6 + $0x328] sm:$0xff]
    %v249 = vld [vmem:[#allocation6 + $0x330] sm:$0xff]
    %v250 = vld [vmem:[#allocation6 + $0x338] sm:$0xff]
    %v251 = vld [vmem:[#allocation6 + $0x340] sm:$0xff]
    %v252 = vld [vmem:[#allocation6 + $0x348] sm:$0xff]
    %v253 = vld [vmem:[#allocation6 + $0x350] sm:$0xff]
    %v254 = vld [vmem:[#allocation6 + $0x358] sm:$0xff]
    %v255 = vld [vmem:[#allocation6 + $0x360] sm:$0xff]
    %v256 = vld [vmem:[#allocation6 + $0x368] sm:$0xff]
    %v257 = vld [vmem:[#allocation6 + $0x370] sm:$0xff]
    %v258 = vld [vmem:[#allocation6 + $0x378] sm:$0xff]
    %v259 = vld [vmem:[#allocation6 + $0x380] sm:$0xff]
    %v260 = vld [vmem:[#allocation6 + $0x388] sm:$0xff]
    %v261 = vld [vmem:[#allocation6 + $0x390] sm:$0xff]
    %v262 = vld [vmem:[#allocation6 + $0x398] sm:$0xff]
    %v263 = vld [vmem:[#allocation6 + $0x3a0] sm:$0xff]
    %v264 = vld [vmem:[#allocation6 + $0x3a8] sm:$0xff]
    %v265 = vld [vmem:[#allocation6 + $0x3b0] sm:$0xff]
    %v266 = vld [vmem:[#allocation6 + $0x3b8] sm:$0xff]
    %v267 = vld [vmem:[#allocation6 + $0x3c0] sm:$0xff]
    %v268 = vld [vmem:[#allocation6 + $0x3c8] sm:$0xff]
    %v269 = vld [vmem:[#allocation6 + $0x3d0] sm:$0xff]
    %v270 = vld [vmem:[#allocation6 + $0x3d8] sm:$0xff]
    %v271 = vld [vmem:[#allocation6 + $0x3e0] sm:$0xff]
    %v272 = vld [vmem:[#allocation6 + $0x3e8] sm:$0xff]
    %v273 = vld [vmem:[#allocation6 + $0x3f0] sm:$0xff]
    %v274 = vld [vmem:[#allocation6 + $0x3f8] sm:$0xff]
    %v275 = vld [vmem:[#allocation6 + $0x400] sm:$0xff]
    %v276 = vld [vmem:[#allocation6 + $0x408] sm:$0xff]
    %v277 = vld [vmem:[#allocation6 + $0x410] sm:$0xff]
    %v278 = vld [vmem:[#allocation6 + $0x418] sm:$0xff]
    %v279 = vld [vmem:[#allocation6 + $0x420] sm:$0xff]
    %v280 = vld [vmem:[#allocation6 + $0x428] sm:$0xff]
    %v281 = vld [vmem:[#allocation6 + $0x430] sm:$0xff]
    %v282 = vld [vmem:[#allocation6 + $0x438] sm:$0xff]
    %v283 = vld [vmem:[#allocation6 + $0x440] sm:$0xff]
    %v284 = vld [vmem:[#allocation6 + $0x448] sm:$0xff]
    %v285 = vld [vmem:[#allocation6 + $0x450] sm:$0xff]
    %v286 = vld [vmem:[#allocation6 + $0x458] sm:$0xff]
    %v287 = vld [vmem:[#allocation6 + $0x460] sm:$0xff]
    %v288 = vld [vmem:[#allocation6 + $0x468] sm:$0xff]
    %v289 = vld [vmem:[#allocation6 + $0x470] sm:$0xff]
    %v290 = vld [vmem:[#allocation6 + $0x478] sm:$0xff]
    %v291 = vld [vmem:[#allocation6 + $0x480] sm:$0xff]
    %v292 = vld [vmem:[#allocation6 + $0x488] sm:$0xff]
    %v293 = vld [vmem:[#allocation6 + $0x490] sm:$0xff]
    %v294 = vld [vmem:[#allocation6 + $0x498] sm:$0xff]
    %v295 = vld [vmem:[#allocation6 + $0x4a0] sm:$0xff]
    %v296 = vld [vmem:[#allocation6 + $0x4a8] sm:$0xff]
    %v297 = vld [vmem:[#allocation6 + $0x4b0] sm:$0xff]
    %v298 = vld [vmem:[#allocation6 + $0x4b8] sm:$0xff]
    %v299 = vld [vmem:[#allocation6 + $0x4c0] sm:$0xff]
    %v300 = vld [vmem:[#allocation6 + $0x4c8] sm:$0xff]
    %v301 = vld [vmem:[#allocation6 + $0x4d0] sm:$0xff]
    %v302 = vld [vmem:[#allocation6 + $0x4d8] sm:$0xff]
    %v303 = vld [vmem:[#allocation6 + $0x4e0] sm:$0xff]
    %v304 = vld [vmem:[#allocation6 + $0x4e8] sm:$0xff]
    %v305 = vld [vmem:[#allocation6 + $0x4f0] sm:$0xff]
    %v306 = vld [vmem:[#allocation6 + $0x4f8] sm:$0xff]
    %v307 = vld [vmem:[#allocation6 + $0x500] sm:$0xff]
    %v308 = vld [vmem:[#allocation6 + $0x508] sm:$0xff]
    %v309 = vld [vmem:[#allocation6 + $0x510] sm:$0xff]
    %v310 = vld [vmem:[#allocation6 + $0x518] sm:$0xff]
    %v311 = vld [vmem:[#allocation6 + $0x520] sm:$0xff]
    %v312 = vld [vmem:[#allocation6 + $0x528] sm:$0xff]
    %v313 = vld [vmem:[#allocation6 + $0x530] sm:$0xff]
    %v314 = vld [vmem:[#allocation6 + $0x538] sm:$0xff]
    %v315 = vld [vmem:[#allocation6 + $0x540] sm:$0xff]
    %v316 = vld [vmem:[#allocation6 + $0x548] sm:$0xff]
    %v317 = vld [vmem:[#allocation6 + $0x550] sm:$0xff]
    %v318 = vld [vmem:[#allocation6 + $0x558] sm:$0xff]
    %v319 = vld [vmem:[#allocation6 + $0x560] sm:$0xff]
    %v320 = vld [vmem:[#allocation6 + $0x568] sm:$0xff]
    %v321 = vld [vmem:[#allocation6 + $0x570] sm:$0xff]
    %v322 = vld [vmem:[#allocation6 + $0x578] sm:$0xff]
    %v323 = vld [vmem:[#allocation6 + $0x580] sm:$0xff]
    %v324 = vld [vmem:[#allocation6 + $0x588] sm:$0xff]
    %v325 = vld [vmem:[#allocation6 + $0x590] sm:$0xff]
    %v326 = vld [vmem:[#allocation6 + $0x598] sm:$0xff]
    %v327 = vld [vmem:[#allocation6 + $0x5a0] sm:$0xff]
    %v328 = vld [vmem:[#allocation6 + $0x5a8] sm:$0xff]
    %v329 = vld [vmem:[#allocation6 + $0x5b0] sm:$0xff]
    %v330 = vld [vmem:[#allocation6 + $0x5b8] sm:$0xff]
    %v331 = vld [vmem:[#allocation6 + $0x5c0] sm:$0xff]
    %v332 = vld [vmem:[#allocation6 + $0x5c8] sm:$0xff]
    %v333 = vld [vmem:[#allocation6 + $0x5d0] sm:$0xff]
    %v334 = vld [vmem:[#allocation6 + $0x5d8] sm:$0xff]
    %v335 = vld [vmem:[#allocation6 + $0x5e0] sm:$0xff]
    %v336 = vld [vmem:[#allocation6 + $0x5e8] sm:$0xff]
    %v337 = vld [vmem:[#allocation6 + $0x5f0] sm:$0xff]
    %v338 = vld [vmem:[#allocation6 + $0x5f8] sm:$0xff]
    %v339 = vld [vmem:[#allocation6 + $0x600] sm:$0xff]
    %v340 = vld [vmem:[#allocation6 + $0x608] sm:$0xff]
    %v341 = vld [vmem:[#allocation6 + $0x610] sm:$0xff]
    %v342 = vld [vmem:[#allocation6 + $0x618] sm:$0xff]
    %v343 = vld [vmem:[#allocation6 + $0x620] sm:$0xff]
    %v344 = vld [vmem:[#allocation6 + $0x628] sm:$0xff]
    %v345 = vld [vmem:[#allocation6 + $0x630] sm:$0xff]
    %v346 = vld [vmem:[#allocation6 + $0x638] sm:$0xff]
    %v347 = vld [vmem:[#allocation6 + $0x640] sm:$0xff]
    %v348 = vld [vmem:[#allocation6 + $0x648] sm:$0xff]
    %v349 = vld [vmem:[#allocation6 + $0x650] sm:$0xff]
    %v350 = vld [vmem:[#allocation6 + $0x658] sm:$0xff]
    %v351 = vld [vmem:[#allocation6 + $0x660] sm:$0xff]
    %v352 = vld [vmem:[#allocation6 + $0x668] sm:$0xff]
    %v353 = vld [vmem:[#allocation6 + $0x670] sm:$0xff]
    %v354 = vld [vmem:[#allocation6 + $0x678] sm:$0xff]
    %v355 = vld [vmem:[#allocation6 + $0x680] sm:$0xff]
    %v356 = vld [vmem:[#allocation6 + $0x688] sm:$0xff]
    %v357 = vld [vmem:[#allocation6 + $0x690] sm:$0xff]
    %v358 = vld [vmem:[#allocation6 + $0x698] sm:$0xff]
    %v359 = vld [vmem:[#allocation6 + $0x6a0] sm:$0xff]
    %v360 = vld [vmem:[#allocation6 + $0x6a8] sm:$0xff]
    %v361 = vld [vmem:[#allocation6 + $0x6b0] sm:$0xff]
    %v362 = vld [vmem:[#allocation6 + $0x6b8] sm:$0xff]
    %v363 = vld [vmem:[#allocation6 + $0x6c0] sm:$0xff]
    %v364 = vld [vmem:[#allocation6 + $0x6c8] sm:$0xff]
    %v365 = vld [vmem:[#allocation6 + $0x6d0] sm:$0xff]
    %v366 = vld [vmem:[#allocation6 + $0x6d8] sm:$0xff]
    %v367 = vld [vmem:[#allocation6 + $0x6e0] sm:$0xff]
    %v368 = vld [vmem:[#allocation6 + $0x6e8] sm:$0xff]
    %v369 = vld [vmem:[#allocation6 + $0x6f0] sm:$0xff]
    %v370 = vld [vmem:[#allocation6 + $0x6f8] sm:$0xff]
    %v371 = vld [vmem:[#allocation6 + $0x700] sm:$0xff]
    %v372 = vld [vmem:[#allocation6 + $0x708] sm:$0xff]
    %v373 = vld [vmem:[#allocation6 + $0x710] sm:$0xff]
    %v374 = vld [vmem:[#allocation6 + $0x718] sm:$0xff]
    %v375 = vld [vmem:[#allocation6 + $0x720] sm:$0xff]
    %v376 = vld [vmem:[#allocation6 + $0x728] sm:$0xff]
    %v377 = vld [vmem:[#allocation6 + $0x730] sm:$0xff]
    %v378 = vld [vmem:[#allocation6 + $0x738] sm:$0xff]
    %v379 = vld [vmem:[#allocation6 + $0x740] sm:$0xff]
    %v380 = vld [vmem:[#allocation6 + $0x748] sm:$0xff]
    %v381 = vld [vmem:[#allocation6 + $0x750] sm:$0xff]
    %v382 = vld [vmem:[#allocation6 + $0x758] sm:$0xff]
    %v383 = vld [vmem:[#allocation6 + $0x760] sm:$0xff]
    %v384 = vld [vmem:[#allocation6 + $0x768] sm:$0xff]
    %v385 = vld [vmem:[#allocation6 + $0x770] sm:$0xff]
    %v386 = vld [vmem:[#allocation6 + $0x778] sm:$0xff]
    %v387 = vld [vmem:[#allocation6 + $0x780] sm:$0xff]
    %v388 = vld [vmem:[#allocation6 + $0x788] sm:$0xff]
    %v389 = vld [vmem:[#allocation6 + $0x790] sm:$0xff]
    %v390 = vld [vmem:[#allocation6 + $0x798] sm:$0xff]
    %v391 = vld [vmem:[#allocation6 + $0x7a0] sm:$0xff]
    %v392 = vld [vmem:[#allocation6 + $0x7a8] sm:$0xff]
    %v393 = vld [vmem:[#allocation6 + $0x7b0] sm:$0xff]
    %v394 = vld [vmem:[#allocation6 + $0x7b8] sm:$0xff]
    %v395 = vld [vmem:[#allocation6 + $0x7c0] sm:$0xff]
    %v396 = vld [vmem:[#allocation6 + $0x7c8] sm:$0xff]
    %v397 = vld [vmem:[#allocation6 + $0x7d0] sm:$0xff]
    %v398 = vld [vmem:[#allocation6 + $0x7d8] sm:$0xff]
    %v399 = vld [vmem:[#allocation6 + $0x7e0] sm:$0xff]
    %v400 = vld [vmem:[#allocation6 + $0x7e8] sm:$0xff]
    %v401 = vld [vmem:[#allocation6 + $0x7f0] sm:$0xff]
    %v402 = vld [vmem:[#allocation6 + $0x7f8] sm:$0xff]
    %v403 = vld [vmem:[%s2] sm:$0xf]
    %v405 = vlaneseq
    %v406 = vshrl.u32 %v405, 7
    %v407 = vsub.s32 0, %v406
    %v408 = vrot.slane %v403, %v407
    %v409 = vlaneseq
    %v410 = vshrl.u32 %v409, 7
    %v411 = vsub.s32 1, %v410
    %v412 = vrot.slane %v403, %v411
    %v413 = vlaneseq
    %v414 = vshrl.u32 %v413, 7
    %v415 = vsub.s32 2, %v414
    %v416 = vrot.slane %v403, %v415
    %v417 = vlaneseq
    %v418 = vshrl.u32 %v417, 7
    %v419 = vsub.s32 3, %v418
    %v420 = vrot.slane %v403, %v419
    %v681 = vunpack.c.l.b16 %v147
    %v682 = vunpack.c.h.b16 %v147
    %v683 = vunpack.c.l.b16 %v148
    %v684 = vunpack.c.h.b16 %v148
    %v685 = vunpack.c.l.b16 %v149
    %v686 = vunpack.c.h.b16 %v149
    %v687 = vunpack.c.l.b16 %v150
    %v688 = vunpack.c.h.b16 %v150
    %v689 = vunpack.c.l.b16 %v151
    %v690 = vunpack.c.h.b16 %v151
    %v691 = vunpack.c.l.b16 %v152
    %v692 = vunpack.c.h.b16 %v152
    %v693 = vunpack.c.l.b16 %v153
    %v694 = vunpack.c.h.b16 %v153
    %v695 = vunpack.c.l.b16 %v154
    %v696 = vunpack.c.h.b16 %v154
    %v697 = vunpack.c.l.b16 %v155
    %v698 = vunpack.c.h.b16 %v155
    %v699 = vunpack.c.l.b16 %v156
    %v700 = vunpack.c.h.b16 %v156
    %v701 = vunpack.c.l.b16 %v157
    %v702 = vunpack.c.h.b16 %v157
    %v703 = vunpack.c.l.b16 %v158
    %v704 = vunpack.c.h.b16 %v158
    %v705 = vunpack.c.l.b16 %v159
    %v706 = vunpack.c.h.b16 %v159
    %v707 = vunpack.c.l.b16 %v160
    %v708 = vunpack.c.h.b16 %v160
    %v709 = vunpack.c.l.b16 %v161
    %v710 = vunpack.c.h.b16 %v161
    %v711 = vunpack.c.l.b16 %v162
    %v712 = vunpack.c.h.b16 %v162
    %v713 = vunpack.c.l.b16 %v163
    %v714 = vunpack.c.h.b16 %v163
    %v715 = vunpack.c.l.b16 %v164
    %v716 = vunpack.c.h.b16 %v164
    %v717 = vunpack.c.l.b16 %v165
    %v718 = vunpack.c.h.b16 %v165
    %v719 = vunpack.c.l.b16 %v166
    %v720 = vunpack.c.h.b16 %v166
    %v721 = vunpack.c.l.b16 %v167
    %v722 = vunpack.c.h.b16 %v167
    %v723 = vunpack.c.l.b16 %v168
    %v724 = vunpack.c.h.b16 %v168
    %v725 = vunpack.c.l.b16 %v169
    %v726 = vunpack.c.h.b16 %v169
    %v727 = vunpack.c.l.b16 %v170
    %v728 = vunpack.c.h.b16 %v170
    %v729 = vunpack.c.l.b16 %v171
    %v730 = vunpack.c.h.b16 %v171
    %v731 = vunpack.c.l.b16 %v172
    %v732 = vunpack.c.h.b16 %v172
    %v733 = vunpack.c.l.b16 %v173
    %v734 = vunpack.c.h.b16 %v173
    %v735 = vunpack.c.l.b16 %v174
    %v736 = vunpack.c.h.b16 %v174
    %v737 = vunpack.c.l.b16 %v175
    %v738 = vunpack.c.h.b16 %v175
    %v739 = vunpack.c.l.b16 %v176
    %v740 = vunpack.c.h.b16 %v176
    %v741 = vunpack.c.l.b16 %v177
    %v742 = vunpack.c.h.b16 %v177
    %v743 = vunpack.c.l.b16 %v178
    %v744 = vunpack.c.h.b16 %v178
    %v745 = vunpack.c.l.b16 %v179
    %v746 = vunpack.c.h.b16 %v179
    %v747 = vunpack.c.l.b16 %v180
    %v748 = vunpack.c.h.b16 %v180
    %v749 = vunpack.c.l.b16 %v181
    %v750 = vunpack.c.h.b16 %v181
    %v751 = vunpack.c.l.b16 %v182
    %v752 = vunpack.c.h.b16 %v182
    %v753 = vunpack.c.l.b16 %v183
    %v754 = vunpack.c.h.b16 %v183
    %v755 = vunpack.c.l.b16 %v184
    %v756 = vunpack.c.h.b16 %v184
    %v757 = vunpack.c.l.b16 %v185
    %v758 = vunpack.c.h.b16 %v185
    %v759 = vunpack.c.l.b16 %v186
    %v760 = vunpack.c.h.b16 %v186
    %v761 = vunpack.c.l.b16 %v187
    %v762 = vunpack.c.h.b16 %v187
    %v763 = vunpack.c.l.b16 %v188
    %v764 = vunpack.c.h.b16 %v188
    %v765 = vunpack.c.l.b16 %v189
    %v766 = vunpack.c.h.b16 %v189
    %v767 = vunpack.c.l.b16 %v190
    %v768 = vunpack.c.h.b16 %v190
    %v769 = vunpack.c.l.b16 %v191
    %v770 = vunpack.c.h.b16 %v191
    %v771 = vunpack.c.l.b16 %v192
    %v772 = vunpack.c.h.b16 %v192
    %v773 = vunpack.c.l.b16 %v193
    %v774 = vunpack.c.h.b16 %v193
    %v775 = vunpack.c.l.b16 %v194
    %v776 = vunpack.c.h.b16 %v194
    %v777 = vunpack.c.l.b16 %v195
    %v778 = vunpack.c.h.b16 %v195
    %v779 = vunpack.c.l.b16 %v196
    %v780 = vunpack.c.h.b16 %v196
    %v781 = vunpack.c.l.b16 %v197
    %v782 = vunpack.c.h.b16 %v197
    %v783 = vunpack.c.l.b16 %v198
    %v784 = vunpack.c.h.b16 %v198
    %v785 = vunpack.c.l.b16 %v199
    %v786 = vunpack.c.h.b16 %v199
    %v787 = vunpack.c.l.b16 %v200
    %v788 = vunpack.c.h.b16 %v200
    %v789 = vunpack.c.l.b16 %v201
    %v790 = vunpack.c.h.b16 %v201
    %v791 = vunpack.c.l.b16 %v202
    %v792 = vunpack.c.h.b16 %v202
    %v793 = vunpack.c.l.b16 %v203
    %v794 = vunpack.c.h.b16 %v203
    %v795 = vunpack.c.l.b16 %v204
    %v796 = vunpack.c.h.b16 %v204
    %v797 = vunpack.c.l.b16 %v205
    %v798 = vunpack.c.h.b16 %v205
    %v799 = vunpack.c.l.b16 %v206
    %v800 = vunpack.c.h.b16 %v206
    %v801 = vunpack.c.l.b16 %v207
    %v802 = vunpack.c.h.b16 %v207
    %v803 = vunpack.c.l.b16 %v208
    %v804 = vunpack.c.h.b16 %v208
    %v805 = vunpack.c.l.b16 %v209
    %v806 = vunpack.c.h.b16 %v209
    %v807 = vunpack.c.l.b16 %v210
    %v808 = vunpack.c.h.b16 %v210
    %v809 = vunpack.c.l.b16 %v211
    %v810 = vunpack.c.h.b16 %v211
    %v811 = vunpack.c.l.b16 %v212
    %v812 = vunpack.c.h.b16 %v212
    %v813 = vunpack.c.l.b16 %v213
    %v814 = vunpack.c.h.b16 %v213
    %v815 = vunpack.c.l.b16 %v214
    %v816 = vunpack.c.h.b16 %v214
    %v817 = vunpack.c.l.b16 %v215
    %v818 = vunpack.c.h.b16 %v215
    %v819 = vunpack.c.l.b16 %v216
    %v820 = vunpack.c.h.b16 %v216
    %v821 = vunpack.c.l.b16 %v217
    %v822 = vunpack.c.h.b16 %v217
    %v823 = vunpack.c.l.b16 %v218
    %v824 = vunpack.c.h.b16 %v218
    %v825 = vunpack.c.l.b16 %v219
    %v826 = vunpack.c.h.b16 %v219
    %v827 = vunpack.c.l.b16 %v220
    %v828 = vunpack.c.h.b16 %v220
    %v829 = vunpack.c.l.b16 %v221
    %v830 = vunpack.c.h.b16 %v221
    %v831 = vunpack.c.l.b16 %v222
    %v832 = vunpack.c.h.b16 %v222
    %v833 = vunpack.c.l.b16 %v223
    %v834 = vunpack.c.h.b16 %v223
    %v835 = vunpack.c.l.b16 %v224
    %v836 = vunpack.c.h.b16 %v224
    %v837 = vunpack.c.l.b16 %v225
    %v838 = vunpack.c.h.b16 %v225
    %v839 = vunpack.c.l.b16 %v226
    %v840 = vunpack.c.h.b16 %v226
    %v841 = vunpack.c.l.b16 %v227
    %v842 = vunpack.c.h.b16 %v227
    %v843 = vunpack.c.l.b16 %v228
    %v844 = vunpack.c.h.b16 %v228
    %v845 = vunpack.c.l.b16 %v229
    %v846 = vunpack.c.h.b16 %v229
    %v847 = vunpack.c.l.b16 %v230
    %v848 = vunpack.c.h.b16 %v230
    %v849 = vunpack.c.l.b16 %v231
    %v850 = vunpack.c.h.b16 %v231
    %v851 = vunpack.c.l.b16 %v232
    %v852 = vunpack.c.h.b16 %v232
    %v853 = vunpack.c.l.b16 %v233
    %v854 = vunpack.c.h.b16 %v233
    %v855 = vunpack.c.l.b16 %v234
    %v856 = vunpack.c.h.b16 %v234
    %v857 = vunpack.c.l.b16 %v235
    %v858 = vunpack.c.h.b16 %v235
    %v859 = vunpack.c.l.b16 %v236
    %v860 = vunpack.c.h.b16 %v236
    %v861 = vunpack.c.l.b16 %v237
    %v862 = vunpack.c.h.b16 %v237
    %v863 = vunpack.c.l.b16 %v238
    %v864 = vunpack.c.h.b16 %v238
    %v865 = vunpack.c.l.b16 %v239
    %v866 = vunpack.c.h.b16 %v239
    %v867 = vunpack.c.l.b16 %v240
    %v868 = vunpack.c.h.b16 %v240
    %v869 = vunpack.c.l.b16 %v241
    %v870 = vunpack.c.h.b16 %v241
    %v871 = vunpack.c.l.b16 %v242
    %v872 = vunpack.c.h.b16 %v242
    %v873 = vunpack.c.l.b16 %v243
    %v874 = vunpack.c.h.b16 %v243
    %v875 = vunpack.c.l.b16 %v244
    %v876 = vunpack.c.h.b16 %v244
    %v877 = vunpack.c.l.b16 %v245
    %v878 = vunpack.c.h.b16 %v245
    %v879 = vunpack.c.l.b16 %v246
    %v880 = vunpack.c.h.b16 %v246
    %v881 = vunpack.c.l.b16 %v247
    %v882 = vunpack.c.h.b16 %v247
    %v883 = vunpack.c.l.b16 %v248
    %v884 = vunpack.c.h.b16 %v248
    %v885 = vunpack.c.l.b16 %v249
    %v886 = vunpack.c.h.b16 %v249
    %v887 = vunpack.c.l.b16 %v250
    %v888 = vunpack.c.h.b16 %v250
    %v889 = vunpack.c.l.b16 %v251
    %v890 = vunpack.c.h.b16 %v251
    %v891 = vunpack.c.l.b16 %v252
    %v892 = vunpack.c.h.b16 %v252
    %v893 = vunpack.c.l.b16 %v253
    %v894 = vunpack.c.h.b16 %v253
    %v895 = vunpack.c.l.b16 %v254
    %v896 = vunpack.c.h.b16 %v254
    %v897 = vunpack.c.l.b16 %v255
    %v898 = vunpack.c.h.b16 %v255
    %v899 = vunpack.c.l.b16 %v256
    %v900 = vunpack.c.h.b16 %v256
    %v901 = vunpack.c.l.b16 %v257
    %v902 = vunpack.c.h.b16 %v257
    %v903 = vunpack.c.l.b16 %v258
    %v904 = vunpack.c.h.b16 %v258
    %v905 = vunpack.c.l.b16 %v259
    %v906 = vunpack.c.h.b16 %v259
    %v907 = vunpack.c.l.b16 %v260
    %v908 = vunpack.c.h.b16 %v260
    %v909 = vunpack.c.l.b16 %v261
    %v910 = vunpack.c.h.b16 %v261
    %v911 = vunpack.c.l.b16 %v262
    %v912 = vunpack.c.h.b16 %v262
    %v913 = vunpack.c.l.b16 %v263
    %v914 = vunpack.c.h.b16 %v263
    %v915 = vunpack.c.l.b16 %v264
    %v916 = vunpack.c.h.b16 %v264
    %v917 = vunpack.c.l.b16 %v265
    %v918 = vunpack.c.h.b16 %v265
    %v919 = vunpack.c.l.b16 %v266
    %v920 = vunpack.c.h.b16 %v266
    %v921 = vunpack.c.l.b16 %v267
    %v922 = vunpack.c.h.b16 %v267
    %v923 = vunpack.c.l.b16 %v268
    %v924 = vunpack.c.h.b16 %v268
    %v925 = vunpack.c.l.b16 %v269
    %v926 = vunpack.c.h.b16 %v269
    %v927 = vunpack.c.l.b16 %v270
    %v928 = vunpack.c.h.b16 %v270
    %v929 = vunpack.c.l.b16 %v271
    %v930 = vunpack.c.h.b16 %v271
    %v931 = vunpack.c.l.b16 %v272
    %v932 = vunpack.c.h.b16 %v272
    %v933 = vunpack.c.l.b16 %v273
    %v934 = vunpack.c.h.b16 %v273
    %v935 = vunpack.c.l.b16 %v274
    %v936 = vunpack.c.h.b16 %v274
    %v937 = vunpack.c.l.b16 %v275
    %v938 = vunpack.c.h.b16 %v275
    %v939 = vunpack.c.l.b16 %v276
    %v940 = vunpack.c.h.b16 %v276
    %v941 = vunpack.c.l.b16 %v277
    %v942 = vunpack.c.h.b16 %v277
    %v943 = vunpack.c.l.b16 %v278
    %v944 = vunpack.c.h.b16 %v278
    %v945 = vunpack.c.l.b16 %v279
    %v946 = vunpack.c.h.b16 %v279
    %v947 = vunpack.c.l.b16 %v280
    %v948 = vunpack.c.h.b16 %v280
    %v949 = vunpack.c.l.b16 %v281
    %v950 = vunpack.c.h.b16 %v281
    %v951 = vunpack.c.l.b16 %v282
    %v952 = vunpack.c.h.b16 %v282
    %v953 = vunpack.c.l.b16 %v283
    %v954 = vunpack.c.h.b16 %v283
    %v955 = vunpack.c.l.b16 %v284
    %v956 = vunpack.c.h.b16 %v284
    %v957 = vunpack.c.l.b16 %v285
    %v958 = vunpack.c.h.b16 %v285
    %v959 = vunpack.c.l.b16 %v286
    %v960 = vunpack.c.h.b16 %v286
    %v961 = vunpack.c.l.b16 %v287
    %v962 = vunpack.c.h.b16 %v287
    %v963 = vunpack.c.l.b16 %v288
    %v964 = vunpack.c.h.b16 %v288
    %v965 = vunpack.c.l.b16 %v289
    %v966 = vunpack.c.h.b16 %v289
    %v967 = vunpack.c.l.b16 %v290
    %v968 = vunpack.c.h.b16 %v290
    %v969 = vunpack.c.l.b16 %v291
    %v970 = vunpack.c.h.b16 %v291
    %v971 = vunpack.c.l.b16 %v292
    %v972 = vunpack.c.h.b16 %v292
    %v973 = vunpack.c.l.b16 %v293
    %v974 = vunpack.c.h.b16 %v293
    %v975 = vunpack.c.l.b16 %v294
    %v976 = vunpack.c.h.b16 %v294
    %v977 = vunpack.c.l.b16 %v295
    %v978 = vunpack.c.h.b16 %v295
    %v979 = vunpack.c.l.b16 %v296
    %v980 = vunpack.c.h.b16 %v296
    %v981 = vunpack.c.l.b16 %v297
    %v982 = vunpack.c.h.b16 %v297
    %v983 = vunpack.c.l.b16 %v298
    %v984 = vunpack.c.h.b16 %v298
    %v985 = vunpack.c.l.b16 %v299
    %v986 = vunpack.c.h.b16 %v299
    %v987 = vunpack.c.l.b16 %v300
    %v988 = vunpack.c.h.b16 %v300
    %v989 = vunpack.c.l.b16 %v301
    %v990 = vunpack.c.h.b16 %v301
    %v991 = vunpack.c.l.b16 %v302
    %v992 = vunpack.c.h.b16 %v302
    %v993 = vunpack.c.l.b16 %v303
    %v994 = vunpack.c.h.b16 %v303
    %v995 = vunpack.c.l.b16 %v304
    %v996 = vunpack.c.h.b16 %v304
    %v997 = vunpack.c.l.b16 %v305
    %v998 = vunpack.c.h.b16 %v305
    %v999 = vunpack.c.l.b16 %v306
    %v1000 = vunpack.c.h.b16 %v306
    %v1001 = vunpack.c.l.b16 %v307
    %v1002 = vunpack.c.h.b16 %v307
    %v1003 = vunpack.c.l.b16 %v308
    %v1004 = vunpack.c.h.b16 %v308
    %v1005 = vunpack.c.l.b16 %v309
    %v1006 = vunpack.c.h.b16 %v309
    %v1007 = vunpack.c.l.b16 %v310
    %v1008 = vunpack.c.h.b16 %v310
    %v1009 = vunpack.c.l.b16 %v311
    %v1010 = vunpack.c.h.b16 %v311
    %v1011 = vunpack.c.l.b16 %v312
    %v1012 = vunpack.c.h.b16 %v312
    %v1013 = vunpack.c.l.b16 %v313
    %v1014 = vunpack.c.h.b16 %v313
    %v1015 = vunpack.c.l.b16 %v314
    %v1016 = vunpack.c.h.b16 %v314
    %v1017 = vunpack.c.l.b16 %v315
    %v1018 = vunpack.c.h.b16 %v315
    %v1019 = vunpack.c.l.b16 %v316
    %v1020 = vunpack.c.h.b16 %v316
    %v1021 = vunpack.c.l.b16 %v317
    %v1022 = vunpack.c.h.b16 %v317
    %v1023 = vunpack.c.l.b16 %v318
    %v1024 = vunpack.c.h.b16 %v318
    %v1025 = vunpack.c.l.b16 %v319
    %v1026 = vunpack.c.h.b16 %v319
    %v1027 = vunpack.c.l.b16 %v320
    %v1028 = vunpack.c.h.b16 %v320
    %v1029 = vunpack.c.l.b16 %v321
    %v1030 = vunpack.c.h.b16 %v321
    %v1031 = vunpack.c.l.b16 %v322
    %v1032 = vunpack.c.h.b16 %v322
    %v1033 = vunpack.c.l.b16 %v323
    %v1034 = vunpack.c.h.b16 %v323
    %v1035 = vunpack.c.l.b16 %v324
    %v1036 = vunpack.c.h.b16 %v324
    %v1037 = vunpack.c.l.b16 %v325
    %v1038 = vunpack.c.h.b16 %v325
    %v1039 = vunpack.c.l.b16 %v326
    %v1040 = vunpack.c.h.b16 %v326
    %v1041 = vunpack.c.l.b16 %v327
    %v1042 = vunpack.c.h.b16 %v327
    %v1043 = vunpack.c.l.b16 %v328
    %v1044 = vunpack.c.h.b16 %v328
    %v1045 = vunpack.c.l.b16 %v329
    %v1046 = vunpack.c.h.b16 %v329
    %v1047 = vunpack.c.l.b16 %v330
    %v1048 = vunpack.c.h.b16 %v330
    %v1049 = vunpack.c.l.b16 %v331
    %v1050 = vunpack.c.h.b16 %v331
    %v1051 = vunpack.c.l.b16 %v332
    %v1052 = vunpack.c.h.b16 %v332
    %v1053 = vunpack.c.l.b16 %v333
    %v1054 = vunpack.c.h.b16 %v333
    %v1055 = vunpack.c.l.b16 %v334
    %v1056 = vunpack.c.h.b16 %v334
    %v1057 = vunpack.c.l.b16 %v335
    %v1058 = vunpack.c.h.b16 %v335
    %v1059 = vunpack.c.l.b16 %v336
    %v1060 = vunpack.c.h.b16 %v336
    %v1061 = vunpack.c.l.b16 %v337
    %v1062 = vunpack.c.h.b16 %v337
    %v1063 = vunpack.c.l.b16 %v338
    %v1064 = vunpack.c.h.b16 %v338
    %v1065 = vunpack.c.l.b16 %v339
    %v1066 = vunpack.c.h.b16 %v339
    %v1067 = vunpack.c.l.b16 %v340
    %v1068 = vunpack.c.h.b16 %v340
    %v1069 = vunpack.c.l.b16 %v341
    %v1070 = vunpack.c.h.b16 %v341
    %v1071 = vunpack.c.l.b16 %v342
    %v1072 = vunpack.c.h.b16 %v342
    %v1073 = vunpack.c.l.b16 %v343
    %v1074 = vunpack.c.h.b16 %v343
    %v1075 = vunpack.c.l.b16 %v344
    %v1076 = vunpack.c.h.b16 %v344
    %v1077 = vunpack.c.l.b16 %v345
    %v1078 = vunpack.c.h.b16 %v345
    %v1079 = vunpack.c.l.b16 %v346
    %v1080 = vunpack.c.h.b16 %v346
    %v1081 = vunpack.c.l.b16 %v347
    %v1082 = vunpack.c.h.b16 %v347
    %v1083 = vunpack.c.l.b16 %v348
    %v1084 = vunpack.c.h.b16 %v348
    %v1085 = vunpack.c.l.b16 %v349
    %v1086 = vunpack.c.h.b16 %v349
    %v1087 = vunpack.c.l.b16 %v350
    %v1088 = vunpack.c.h.b16 %v350
    %v1089 = vunpack.c.l.b16 %v351
    %v1090 = vunpack.c.h.b16 %v351
    %v1091 = vunpack.c.l.b16 %v352
    %v1092 = vunpack.c.h.b16 %v352
    %v1093 = vunpack.c.l.b16 %v353
    %v1094 = vunpack.c.h.b16 %v353
    %v1095 = vunpack.c.l.b16 %v354
    %v1096 = vunpack.c.h.b16 %v354
    %v1097 = vunpack.c.l.b16 %v355
    %v1098 = vunpack.c.h.b16 %v355
    %v1099 = vunpack.c.l.b16 %v356
    %v1100 = vunpack.c.h.b16 %v356
    %v1101 = vunpack.c.l.b16 %v357
    %v1102 = vunpack.c.h.b16 %v357
    %v1103 = vunpack.c.l.b16 %v358
    %v1104 = vunpack.c.h.b16 %v358
    %v1105 = vunpack.c.l.b16 %v359
    %v1106 = vunpack.c.h.b16 %v359
    %v1107 = vunpack.c.l.b16 %v360
    %v1108 = vunpack.c.h.b16 %v360
    %v1109 = vunpack.c.l.b16 %v361
    %v1110 = vunpack.c.h.b16 %v361
    %v1111 = vunpack.c.l.b16 %v362
    %v1112 = vunpack.c.h.b16 %v362
    %v1113 = vunpack.c.l.b16 %v363
    %v1114 = vunpack.c.h.b16 %v363
    %v1115 = vunpack.c.l.b16 %v364
    %v1116 = vunpack.c.h.b16 %v364
    %v1117 = vunpack.c.l.b16 %v365
    %v1118 = vunpack.c.h.b16 %v365
    %v1119 = vunpack.c.l.b16 %v366
    %v1120 = vunpack.c.h.b16 %v366
    %v1121 = vunpack.c.l.b16 %v367
    %v1122 = vunpack.c.h.b16 %v367
    %v1123 = vunpack.c.l.b16 %v368
    %v1124 = vunpack.c.h.b16 %v368
    %v1125 = vunpack.c.l.b16 %v369
    %v1126 = vunpack.c.h.b16 %v369
    %v1127 = vunpack.c.l.b16 %v370
    %v1128 = vunpack.c.h.b16 %v370
    %v1129 = vunpack.c.l.b16 %v371
    %v1130 = vunpack.c.h.b16 %v371
    %v1131 = vunpack.c.l.b16 %v372
    %v1132 = vunpack.c.h.b16 %v372
    %v1133 = vunpack.c.l.b16 %v373
    %v1134 = vunpack.c.h.b16 %v373
    %v1135 = vunpack.c.l.b16 %v374
    %v1136 = vunpack.c.h.b16 %v374
    %v1137 = vunpack.c.l.b16 %v375
    %v1138 = vunpack.c.h.b16 %v375
    %v1139 = vunpack.c.l.b16 %v376
    %v1140 = vunpack.c.h.b16 %v376
    %v1141 = vunpack.c.l.b16 %v377
    %v1142 = vunpack.c.h.b16 %v377
    %v1143 = vunpack.c.l.b16 %v378
    %v1144 = vunpack.c.h.b16 %v378
    %v1145 = vunpack.c.l.b16 %v379
    %v1146 = vunpack.c.h.b16 %v379
    %v1147 = vunpack.c.l.b16 %v380
    %v1148 = vunpack.c.h.b16 %v380
    %v1149 = vunpack.c.l.b16 %v381
    %v1150 = vunpack.c.h.b16 %v381
    %v1151 = vunpack.c.l.b16 %v382
    %v1152 = vunpack.c.h.b16 %v382
    %v1153 = vunpack.c.l.b16 %v383
    %v1154 = vunpack.c.h.b16 %v383
    %v1155 = vunpack.c.l.b16 %v384
    %v1156 = vunpack.c.h.b16 %v384
    %v1157 = vunpack.c.l.b16 %v385
    %v1158 = vunpack.c.h.b16 %v385
    %v1159 = vunpack.c.l.b16 %v386
    %v1160 = vunpack.c.h.b16 %v386
    %v1161 = vunpack.c.l.b16 %v387
    %v1162 = vunpack.c.h.b16 %v387
    %v1163 = vunpack.c.l.b16 %v388
    %v1164 = vunpack.c.h.b16 %v388
    %v1165 = vunpack.c.l.b16 %v389
    %v1166 = vunpack.c.h.b16 %v389
    %v1167 = vunpack.c.l.b16 %v390
    %v1168 = vunpack.c.h.b16 %v390
    %v1169 = vunpack.c.l.b16 %v391
    %v1170 = vunpack.c.h.b16 %v391
    %v1171 = vunpack.c.l.b16 %v392
    %v1172 = vunpack.c.h.b16 %v392
    %v1173 = vunpack.c.l.b16 %v393
    %v1174 = vunpack.c.h.b16 %v393
    %v1175 = vunpack.c.l.b16 %v394
    %v1176 = vunpack.c.h.b16 %v394
    %v1177 = vunpack.c.l.b16 %v395
    %v1178 = vunpack.c.h.b16 %v395
    %v1179 = vunpack.c.l.b16 %v396
    %v1180 = vunpack.c.h.b16 %v396
    %v1181 = vunpack.c.l.b16 %v397
    %v1182 = vunpack.c.h.b16 %v397
    %v1183 = vunpack.c.l.b16 %v398
    %v1184 = vunpack.c.h.b16 %v398
    %v1185 = vunpack.c.l.b16 %v399
    %v1186 = vunpack.c.h.b16 %v399
    %v1187 = vunpack.c.l.b16 %v400
    %v1188 = vunpack.c.h.b16 %v400
    %v1189 = vunpack.c.l.b16 %v401
    %v1190 = vunpack.c.h.b16 %v401
    %v1191 = vunpack.c.l.b16 %v402
    %v1192 = vunpack.c.h.b16 %v402
    %v1193 = vpack.c.b16 %v685, %v681
    %v1194 = vpack.c.b16 %v686, %v682
    %v1195 = vpack.c.b16 %v687, %v683
    %v1196 = vpack.c.b16 %v688, %v684
    %v1197 = vpack.c.b16 %v693, %v689
    %v1198 = vpack.c.b16 %v694, %v690
    %v1199 = vpack.c.b16 %v695, %v691
    %v1200 = vpack.c.b16 %v696, %v692
    %v1201 = vpack.c.b16 %v701, %v697
    %v1202 = vpack.c.b16 %v702, %v698
    %v1203 = vpack.c.b16 %v703, %v699
    %v1204 = vpack.c.b16 %v704, %v700
    %v1205 = vpack.c.b16 %v709, %v705
    %v1206 = vpack.c.b16 %v710, %v706
    %v1207 = vpack.c.b16 %v711, %v707
    %v1208 = vpack.c.b16 %v712, %v708
    %v1209 = vpack.c.b16 %v717, %v713
    %v1210 = vpack.c.b16 %v718, %v714
    %v1211 = vpack.c.b16 %v719, %v715
    %v1212 = vpack.c.b16 %v720, %v716
    %v1213 = vpack.c.b16 %v725, %v721
    %v1214 = vpack.c.b16 %v726, %v722
    %v1215 = vpack.c.b16 %v727, %v723
    %v1216 = vpack.c.b16 %v728, %v724
    %v1217 = vpack.c.b16 %v733, %v729
    %v1218 = vpack.c.b16 %v734, %v730
    %v1219 = vpack.c.b16 %v735, %v731
    %v1220 = vpack.c.b16 %v736, %v732
    %v1221 = vpack.c.b16 %v741, %v737
    %v1222 = vpack.c.b16 %v742, %v738
    %v1223 = vpack.c.b16 %v743, %v739
    %v1224 = vpack.c.b16 %v744, %v740
    %v1225 = vpack.c.b16 %v749, %v745
    %v1226 = vpack.c.b16 %v750, %v746
    %v1227 = vpack.c.b16 %v751, %v747
    %v1228 = vpack.c.b16 %v752, %v748
    %v1229 = vpack.c.b16 %v757, %v753
    %v1230 = vpack.c.b16 %v758, %v754
    %v1231 = vpack.c.b16 %v759, %v755
    %v1232 = vpack.c.b16 %v760, %v756
    %v1233 = vpack.c.b16 %v765, %v761
    %v1234 = vpack.c.b16 %v766, %v762
    %v1235 = vpack.c.b16 %v767, %v763
    %v1236 = vpack.c.b16 %v768, %v764
    %v1237 = vpack.c.b16 %v773, %v769
    %v1238 = vpack.c.b16 %v774, %v770
    %v1239 = vpack.c.b16 %v775, %v771
    %v1240 = vpack.c.b16 %v776, %v772
    %v1241 = vpack.c.b16 %v781, %v777
    %v1242 = vpack.c.b16 %v782, %v778
    %v1243 = vpack.c.b16 %v783, %v779
    %v1244 = vpack.c.b16 %v784, %v780
    %v1245 = vpack.c.b16 %v789, %v785
    %v1246 = vpack.c.b16 %v790, %v786
    %v1247 = vpack.c.b16 %v791, %v787
    %v1248 = vpack.c.b16 %v792, %v788
    %v1249 = vpack.c.b16 %v797, %v793
    %v1250 = vpack.c.b16 %v798, %v794
    %v1251 = vpack.c.b16 %v799, %v795
    %v1252 = vpack.c.b16 %v800, %v796
    %v1253 = vpack.c.b16 %v805, %v801
    %v1254 = vpack.c.b16 %v806, %v802
    %v1255 = vpack.c.b16 %v807, %v803
    %v1256 = vpack.c.b16 %v808, %v804
    %v1257 = vpack.c.b16 %v813, %v809
    %v1258 = vpack.c.b16 %v814, %v810
    %v1259 = vpack.c.b16 %v815, %v811
    %v1260 = vpack.c.b16 %v816, %v812
    %v1261 = vpack.c.b16 %v821, %v817
    %v1262 = vpack.c.b16 %v822, %v818
    %v1263 = vpack.c.b16 %v823, %v819
    %v1264 = vpack.c.b16 %v824, %v820
    %v1265 = vpack.c.b16 %v829, %v825
    %v1266 = vpack.c.b16 %v830, %v826
    %v1267 = vpack.c.b16 %v831, %v827
    %v1268 = vpack.c.b16 %v832, %v828
    %v1269 = vpack.c.b16 %v837, %v833
    %v1270 = vpack.c.b16 %v838, %v834
    %v1271 = vpack.c.b16 %v839, %v835
    %v1272 = vpack.c.b16 %v840, %v836
    %v1273 = vpack.c.b16 %v845, %v841
    %v1274 = vpack.c.b16 %v846, %v842
    %v1275 = vpack.c.b16 %v847, %v843
    %v1276 = vpack.c.b16 %v848, %v844
    %v1277 = vpack.c.b16 %v853, %v849
    %v1278 = vpack.c.b16 %v854, %v850
    %v1279 = vpack.c.b16 %v855, %v851
    %v1280 = vpack.c.b16 %v856, %v852
    %v1281 = vpack.c.b16 %v861, %v857
    %v1282 = vpack.c.b16 %v862, %v858
    %v1283 = vpack.c.b16 %v863, %v859
    %v1284 = vpack.c.b16 %v864, %v860
    %v1285 = vpack.c.b16 %v869, %v865
    %v1286 = vpack.c.b16 %v870, %v866
    %v1287 = vpack.c.b16 %v871, %v867
    %v1288 = vpack.c.b16 %v872, %v868
    %v1289 = vpack.c.b16 %v877, %v873
    %v1290 = vpack.c.b16 %v878, %v874
    %v1291 = vpack.c.b16 %v879, %v875
    %v1292 = vpack.c.b16 %v880, %v876
    %v1293 = vpack.c.b16 %v885, %v881
    %v1294 = vpack.c.b16 %v886, %v882
    %v1295 = vpack.c.b16 %v887, %v883
    %v1296 = vpack.c.b16 %v888, %v884
    %v1297 = vpack.c.b16 %v893, %v889
    %v1298 = vpack.c.b16 %v894, %v890
    %v1299 = vpack.c.b16 %v895, %v891
    %v1300 = vpack.c.b16 %v896, %v892
    %v1301 = vpack.c.b16 %v901, %v897
    %v1302 = vpack.c.b16 %v902, %v898
    %v1303 = vpack.c.b16 %v903, %v899
    %v1304 = vpack.c.b16 %v904, %v900
    %v1305 = vpack.c.b16 %v909, %v905
    %v1306 = vpack.c.b16 %v910, %v906
    %v1307 = vpack.c.b16 %v911, %v907
    %v1308 = vpack.c.b16 %v912, %v908
    %v1309 = vpack.c.b16 %v917, %v913
    %v1310 = vpack.c.b16 %v918, %v914
    %v1311 = vpack.c.b16 %v919, %v915
    %v1312 = vpack.c.b16 %v920, %v916
    %v1313 = vpack.c.b16 %v925, %v921
    %v1314 = vpack.c.b16 %v926, %v922
    %v1315 = vpack.c.b16 %v927, %v923
    %v1316 = vpack.c.b16 %v928, %v924
    %v1317 = vpack.c.b16 %v933, %v929
    %v1318 = vpack.c.b16 %v934, %v930
    %v1319 = vpack.c.b16 %v935, %v931
    %v1320 = vpack.c.b16 %v936, %v932
    %v1321 = vpack.c.b16 %v941, %v937
    %v1322 = vpack.c.b16 %v942, %v938
    %v1323 = vpack.c.b16 %v943, %v939
    %v1324 = vpack.c.b16 %v944, %v940
    %v1325 = vpack.c.b16 %v949, %v945
    %v1326 = vpack.c.b16 %v950, %v946
    %v1327 = vpack.c.b16 %v951, %v947
    %v1328 = vpack.c.b16 %v952, %v948
    %v1329 = vpack.c.b16 %v957, %v953
    %v1330 = vpack.c.b16 %v958, %v954
    %v1331 = vpack.c.b16 %v959, %v955
    %v1332 = vpack.c.b16 %v960, %v956
    %v1333 = vpack.c.b16 %v965, %v961
    %v1334 = vpack.c.b16 %v966, %v962
    %v1335 = vpack.c.b16 %v967, %v963
    %v1336 = vpack.c.b16 %v968, %v964
    %v1337 = vpack.c.b16 %v973, %v969
    %v1338 = vpack.c.b16 %v974, %v970
    %v1339 = vpack.c.b16 %v975, %v971
    %v1340 = vpack.c.b16 %v976, %v972
    %v1341 = vpack.c.b16 %v981, %v977
    %v1342 = vpack.c.b16 %v982, %v978
    %v1343 = vpack.c.b16 %v983, %v979
    %v1344 = vpack.c.b16 %v984, %v980
    %v1345 = vpack.c.b16 %v989, %v985
    %v1346 = vpack.c.b16 %v990, %v986
    %v1347 = vpack.c.b16 %v991, %v987
    %v1348 = vpack.c.b16 %v992, %v988
    %v1349 = vpack.c.b16 %v997, %v993
    %v1350 = vpack.c.b16 %v998, %v994
    %v1351 = vpack.c.b16 %v999, %v995
    %v1352 = vpack.c.b16 %v1000, %v996
    %v1353 = vpack.c.b16 %v1005, %v1001
    %v1354 = vpack.c.b16 %v1006, %v1002
    %v1355 = vpack.c.b16 %v1007, %v1003
    %v1356 = vpack.c.b16 %v1008, %v1004
    %v1357 = vpack.c.b16 %v1013, %v1009
    %v1358 = vpack.c.b16 %v1014, %v1010
    %v1359 = vpack.c.b16 %v1015, %v1011
    %v1360 = vpack.c.b16 %v1016, %v1012
    %v1361 = vpack.c.b16 %v1021, %v1017
    %v1362 = vpack.c.b16 %v1022, %v1018
    %v1363 = vpack.c.b16 %v1023, %v1019
    %v1364 = vpack.c.b16 %v1024, %v1020
    %v1365 = vpack.c.b16 %v1029, %v1025
    %v1366 = vpack.c.b16 %v1030, %v1026
    %v1367 = vpack.c.b16 %v1031, %v1027
    %v1368 = vpack.c.b16 %v1032, %v1028
    %v1369 = vpack.c.b16 %v1037, %v1033
    %v1370 = vpack.c.b16 %v1038, %v1034
    %v1371 = vpack.c.b16 %v1039, %v1035
    %v1372 = vpack.c.b16 %v1040, %v1036
    %v1373 = vpack.c.b16 %v1045, %v1041
    %v1374 = vpack.c.b16 %v1046, %v1042
    %v1375 = vpack.c.b16 %v1047, %v1043
    %v1376 = vpack.c.b16 %v1048, %v1044
    %v1377 = vpack.c.b16 %v1053, %v1049
    %v1378 = vpack.c.b16 %v1054, %v1050
    %v1379 = vpack.c.b16 %v1055, %v1051
    %v1380 = vpack.c.b16 %v1056, %v1052
    %v1381 = vpack.c.b16 %v1061, %v1057
    %v1382 = vpack.c.b16 %v1062, %v1058
    %v1383 = vpack.c.b16 %v1063, %v1059
    %v1384 = vpack.c.b16 %v1064, %v1060
    %v1385 = vpack.c.b16 %v1069, %v1065
    %v1386 = vpack.c.b16 %v1070, %v1066
    %v1387 = vpack.c.b16 %v1071, %v1067
    %v1388 = vpack.c.b16 %v1072, %v1068
    %v1389 = vpack.c.b16 %v1077, %v1073
    %v1390 = vpack.c.b16 %v1078, %v1074
    %v1391 = vpack.c.b16 %v1079, %v1075
    %v1392 = vpack.c.b16 %v1080, %v1076
    %v1393 = vpack.c.b16 %v1085, %v1081
    %v1394 = vpack.c.b16 %v1086, %v1082
    %v1395 = vpack.c.b16 %v1087, %v1083
    %v1396 = vpack.c.b16 %v1088, %v1084
    %v1397 = vpack.c.b16 %v1093, %v1089
    %v1398 = vpack.c.b16 %v1094, %v1090
    %v1399 = vpack.c.b16 %v1095, %v1091
    %v1400 = vpack.c.b16 %v1096, %v1092
    %v1401 = vpack.c.b16 %v1101, %v1097
    %v1402 = vpack.c.b16 %v1102, %v1098
    %v1403 = vpack.c.b16 %v1103, %v1099
    %v1404 = vpack.c.b16 %v1104, %v1100
    %v1405 = vpack.c.b16 %v1109, %v1105
    %v1406 = vpack.c.b16 %v1110, %v1106
    %v1407 = vpack.c.b16 %v1111, %v1107
    %v1408 = vpack.c.b16 %v1112, %v1108
    %v1409 = vpack.c.b16 %v1117, %v1113
    %v1410 = vpack.c.b16 %v1118, %v1114
    %v1411 = vpack.c.b16 %v1119, %v1115
    %v1412 = vpack.c.b16 %v1120, %v1116
    %v1413 = vpack.c.b16 %v1125, %v1121
    %v1414 = vpack.c.b16 %v1126, %v1122
    %v1415 = vpack.c.b16 %v1127, %v1123
    %v1416 = vpack.c.b16 %v1128, %v1124
    %v1417 = vpack.c.b16 %v1133, %v1129
    %v1418 = vpack.c.b16 %v1134, %v1130
    %v1419 = vpack.c.b16 %v1135, %v1131
    %v1420 = vpack.c.b16 %v1136, %v1132
    %v1421 = vpack.c.b16 %v1141, %v1137
    %v1422 = vpack.c.b16 %v1142, %v1138
    %v1423 = vpack.c.b16 %v1143, %v1139
    %v1424 = vpack.c.b16 %v1144, %v1140
    %v1425 = vpack.c.b16 %v1149, %v1145
    %v1426 = vpack.c.b16 %v1150, %v1146
    %v1427 = vpack.c.b16 %v1151, %v1147
    %v1428 = vpack.c.b16 %v1152, %v1148
    %v1429 = vpack.c.b16 %v1157, %v1153
    %v1430 = vpack.c.b16 %v1158, %v1154
    %v1431 = vpack.c.b16 %v1159, %v1155
    %v1432 = vpack.c.b16 %v1160, %v1156
    %v1433 = vpack.c.b16 %v1165, %v1161
    %v1434 = vpack.c.b16 %v1166, %v1162
    %v1435 = vpack.c.b16 %v1167, %v1163
    %v1436 = vpack.c.b16 %v1168, %v1164
    %v1437 = vpack.c.b16 %v1173, %v1169
    %v1438 = vpack.c.b16 %v1174, %v1170
    %v1439 = vpack.c.b16 %v1175, %v1171
    %v1440 = vpack.c.b16 %v1176, %v1172
    %v1441 = vpack.c.b16 %v1181, %v1177
    %v1442 = vpack.c.b16 %v1182, %v1178
    %v1443 = vpack.c.b16 %v1183, %v1179
    %v1444 = vpack.c.b16 %v1184, %v1180
    %v1445 = vpack.c.b16 %v1189, %v1185
    %v1446 = vpack.c.b16 %v1190, %v1186
    %v1447 = vpack.c.b16 %v1191, %v1187
    %v1448 = vpack.c.b16 %v1192, %v1188
    %1705 = vmatprep.subr.bf16.mxu0 %v1194
    %1706 = vmatpush1.bf16.msra.mxu0 %v1193
    %1707 = vmatprep.subr.bf16.mxu0 %v1198
    %1708 = vmatpush1.bf16.msra.mxu0 %v1197
    %1709 = vmatprep.subr.bf16.mxu0 %v1202
    %1710 = vmatpush1.bf16.msra.mxu0 %v1201
    %1711 = vmatprep.subr.bf16.mxu0 %v1206
    %1712 = vmatpush1.bf16.msra.mxu0 %v1205
    %1713 = vmatprep.subr.bf16.mxu0 %v1210
    %1714 = vmatpush1.bf16.msra.mxu0 %v1209
    %1715 = vmatprep.subr.bf16.mxu0 %v1214
    %1716 = vmatpush1.bf16.msra.mxu0 %v1213
    %1717 = vmatprep.subr.bf16.mxu0 %v1218
    %1718 = vmatpush1.bf16.msra.mxu0 %v1217
    %1719 = vmatprep.subr.bf16.mxu0 %v1222
    %1720 = vmatpush1.bf16.msra.mxu0 %v1221
    %1721 = vmatprep.subr.bf16.mxu0 %v1226
    %1722 = vmatpush1.bf16.msra.mxu0 %v1225
    %1723 = vmatprep.subr.bf16.mxu0 %v1230
    %1724 = vmatpush1.bf16.msra.mxu0 %v1229
    %1725 = vmatprep.subr.bf16.mxu0 %v1234
    %1726 = vmatpush1.bf16.msra.mxu0 %v1233
    %1727 = vmatprep.subr.bf16.mxu0 %v1238
    %1728 = vmatpush1.bf16.msra.mxu0 %v1237
    %1729 = vmatprep.subr.bf16.mxu0 %v1242
    %1730 = vmatpush1.bf16.msra.mxu0 %v1241
    %1731 = vmatprep.subr.bf16.mxu0 %v1246
    %1732 = vmatpush1.bf16.msra.mxu0 %v1245
    %1733 = vmatprep.subr.bf16.mxu0 %v1250
    %1734 = vmatpush1.bf16.msra.mxu0 %v1249
    %1735 = vmatprep.subr.bf16.mxu0 %v1254
    %1736 = vmatpush1.bf16.msra.mxu0 %v1253
    %1737 = vmatprep.mubr.bf16.mxu0 %v116
    %1738 = vmatmul.mubr.bf16.gmra.mrb[0].mxu0 %v115
    %v1739 = vpop.f32.mrb[0].mxu0
    %v1740 = vadd.f32 %v408, %v1739
    %v1741 = vpop.f32.mrb[0].mxu0
    %v1742 = vadd.f32 %v412, %v1741
    %v1743 = vpop.f32.mrb[0].mxu0
    %v1744 = vadd.f32 %v408, %v1743
    %v1745 = vpop.f32.mrb[0].mxu0
    %v1746 = vadd.f32 %v412, %v1745
    %1747 = vmatprep.mubr.bf16.mxu0 %v124
    %1748 = vmatmul.mubr.bf16.gmra.mrb[0].mxu0 %v123
    %v1749 = vpop.f32.mrb[0].mxu0
    %v1750 = vadd.f32 %v408, %v1749
    %v1751 = vpop.f32.mrb[0].mxu0
    %v1752 = vadd.f32 %v412, %v1751
    %v1753 = vpop.f32.mrb[0].mxu0
    %v1754 = vadd.f32 %v408, %v1753
    %v1755 = vpop.f32.mrb[0].mxu0
    %v1756 = vadd.f32 %v412, %v1755
    %1757 = vmatprep.mubr.bf16.mxu0 %v132
    %1758 = vmatmul.mubr.bf16.gmra.mrb[0].mxu0 %v131
    %v1759 = vpop.f32.mrb[0].mxu0
    %v1760 = vadd.f32 %v408, %v1759
    %v1761 = vpop.f32.mrb[0].mxu0
    %v1762 = vadd.f32 %v412, %v1761
    %v1763 = vpop.f32.mrb[0].mxu0
    %v1764 = vadd.f32 %v408, %v1763
    %v1765 = vpop.f32.mrb[0].mxu0
    %v1766 = vadd.f32 %v412, %v1765
    %1767 = vmatprep.mubr.bf16.mxu0 %v140
    %1768 = vmatmul.mubr.bf16.gmra.mrb[0].mxu0 %v139
    %v1769 = vpop.f32.mrb[0].mxu0
    %v1770 = vadd.f32 %v408, %v1769
    %v1771 = vpop.f32.mrb[0].mxu0
    %v1772 = vadd.f32 %v412, %v1771
    %v1773 = vpop.f32.mrb[0].mxu0
    %v1774 = vadd.f32 %v408, %v1773
    %v1775 = vpop.f32.mrb[0].mxu0
    %v1776 = vadd.f32 %v412, %v1775
    %1777 = vdwg.mxu0
    %1778 = vmatprep.subr.bf16.mxu0 %v1258
    %1779 = vmatpush1.bf16.msra.mxu0 %v1257
    %1780 = vmatprep.subr.bf16.mxu0 %v1262
    %1781 = vmatpush1.bf16.msra.mxu0 %v1261
    %1782 = vmatprep.subr.bf16.mxu0 %v1266
    %1783 = vmatpush1.bf16.msra.mxu0 %v1265
    %1784 = vmatprep.subr.bf16.mxu0 %v1270
    %1785 = vmatpush1.bf16.msra.mxu0 %v1269
    %1786 = vmatprep.subr.bf16.mxu0 %v1274
    %1787 = vmatpush1.bf16.msra.mxu0 %v1273
    %1788 = vmatprep.subr.bf16.mxu0 %v1278
    %1789 = vmatpush1.bf16.msra.mxu0 %v1277
    %1790 = vmatprep.subr.bf16.mxu0 %v1282
    %1791 = vmatpush1.bf16.msra.mxu0 %v1281
    %1792 = vmatprep.subr.bf16.mxu0 %v1286
    %1793 = vmatpush1.bf16.msra.mxu0 %v1285
    %1794 = vmatprep.subr.bf16.mxu0 %v1290
    %1795 = vmatpush1.bf16.msra.mxu0 %v1289
    %1796 = vmatprep.subr.bf16.mxu0 %v1294
    %1797 = vmatpush1.bf16.msra.mxu0 %v1293
    %1798 = vmatprep.subr.bf16.mxu0 %v1298
    %1799 = vmatpush1.bf16.msra.mxu0 %v1297
    %1800 = vmatprep.subr.bf16.mxu0 %v1302
    %1801 = vmatpush1.bf16.msra.mxu0 %v1301
    %1802 = vmatprep.subr.bf16.mxu0 %v1306
    %1803 = vmatpush1.bf16.msra.mxu0 %v1305
    %1804 = vmatprep.subr.bf16.mxu0 %v1310
    %1805 = vmatpush1.bf16.msra.mxu0 %v1309
    %1806 = vmatprep.subr.bf16.mxu0 %v1314
    %1807 = vmatpush1.bf16.msra.mxu0 %v1313
    %1808 = vmatprep.subr.bf16.mxu0 %v1318
    %1809 = vmatpush1.bf16.msra.mxu0 %v1317
    %1810 = vmatprep.mubr.bf16.mxu0 %v118
    %1811 = vmatmul.mubr.bf16.gmra.mrb[0].mxu0 %v117
    %v1812 = vpop.f32.mrb[0].mxu0
    %v1813 = vadd.f32 %v1740, %v1812
    %v1814 = vpop.f32.mrb[0].mxu0
    %v1815 = vadd.f32 %v1742, %v1814
    %v1816 = vpop.f32.mrb[0].mxu0
    %v1817 = vadd.f32 %v1744, %v1816
    %v1818 = vpop.f32.mrb[0].mxu0
    %v1819 = vadd.f32 %v1746, %v1818
    %1820 = vmatprep.mubr.bf16.mxu0 %v126
    %1821 = vmatmul.mubr.bf16.gmra.mrb[0].mxu0 %v125
    %v1822 = vpop.f32.mrb[0].mxu0
    %v1823 = vadd.f32 %v1750, %v1822
    %v1824 = vpop.f32.mrb[0].mxu0
    %v1825 = vadd.f32 %v1752, %v1824
    %v1826 = vpop.f32.mrb[0].mxu0
    %v1827 = vadd.f32 %v1754, %v1826
    %v1828 = vpop.f32.mrb[0].mxu0
    %v1829 = vadd.f32 %v1756, %v1828
    %1830 = vmatprep.mubr.bf16.mxu0 %v134
    %1831 = vmatmul.mubr.bf16.gmra.mrb[0].mxu0 %v133
    %v1832 = vpop.f32.mrb[0].mxu0
    %v1833 = vadd.f32 %v1760, %v1832
    %v1834 = vpop.f32.mrb[0].mxu0
    %v1835 = vadd.f32 %v1762, %v1834
    %v1836 = vpop.f32.mrb[0].mxu0
    %v1837 = vadd.f32 %v1764, %v1836
    %v1838 = vpop.f32.mrb[0].mxu0
    %v1839 = vadd.f32 %v1766, %v1838
    %1840 = vmatprep.mubr.bf16.mxu0 %v142
    %1841 = vmatmul.mubr.bf16.gmra.mrb[0].mxu0 %v141
    %v1842 = vpop.f32.mrb[0].mxu0
    %v1843 = vadd.f32 %v1770, %v1842
    %v1844 = vpop.f32.mrb[0].mxu0
    %v1845 = vadd.f32 %v1772, %v1844
    %v1846 = vpop.f32.mrb[0].mxu0
    %v1847 = vadd.f32 %v1774, %v1846
    %v1848 = vpop.f32.mrb[0].mxu0
    %v1849 = vadd.f32 %v1776, %v1848
    %1850 = vdwg.mxu0
    %1851 = vmatprep.subr.bf16.mxu0 %v1322
    %1852 = vmatpush1.bf16.msra.mxu0 %v1321
    %1853 = vmatprep.subr.bf16.mxu0 %v1326
    %1854 = vmatpush1.bf16.msra.mxu0 %v1325
    %1855 = vmatprep.subr.bf16.mxu0 %v1330
    %1856 = vmatpush1.bf16.msra.mxu0 %v1329
    %1857 = vmatprep.subr.bf16.mxu0 %v1334
    %1858 = vmatpush1.bf16.msra.mxu0 %v1333
    %1859 = vmatprep.subr.bf16.mxu0 %v1338
    %1860 = vmatpush1.bf16.msra.mxu0 %v1337
    %1861 = vmatprep.subr.bf16.mxu0 %v1342
    %1862 = vmatpush1.bf16.msra.mxu0 %v1341
    %1863 = vmatprep.subr.bf16.mxu0 %v1346
    %1864 = vmatpush1.bf16.msra.mxu0 %v1345
    %1865 = vmatprep.subr.bf16.mxu0 %v1350
    %1866 = vmatpush1.bf16.msra.mxu0 %v1349
    %1867 = vmatprep.subr.bf16.mxu0 %v1354
    %1868 = vmatpush1.bf16.msra.mxu0 %v1353
    %1869 = vmatprep.subr.bf16.mxu0 %v1358
    %1870 = vmatpush1.bf16.msra.mxu0 %v1357
    %1871 = vmatprep.subr.bf16.mxu0 %v1362
    %1872 = vmatpush1.bf16.msra.mxu0 %v1361
    %1873 = vmatprep.subr.bf16.mxu0 %v1366
    %1874 = vmatpush1.bf16.msra.mxu0 %v1365
    %1875 = vmatprep.subr.bf16.mxu0 %v1370
    %1876 = vmatpush1.bf16.msra.mxu0 %v1369
    %1877 = vmatprep.subr.bf16.mxu0 %v1374
    %1878 = vmatpush1.bf16.msra.mxu0 %v1373
    %1879 = vmatprep.subr.bf16.mxu0 %v1378
    %1880 = vmatpush1.bf16.msra.mxu0 %v1377
    %1881 = vmatprep.subr.bf16.mxu0 %v1382
    %1882 = vmatpush1.bf16.msra.mxu0 %v1381
    %1883 = vmatprep.mubr.bf16.mxu0 %v120
    %1884 = vmatmul.mubr.bf16.gmra.mrb[0].mxu0 %v119
    %v1885 = vpop.f32.mrb[0].mxu0
    %v1886 = vadd.f32 %v1813, %v1885
    %v1887 = vpop.f32.mrb[0].mxu0
    %v1888 = vadd.f32 %v1815, %v1887
    %v1889 = vpop.f32.mrb[0].mxu0
    %v1890 = vadd.f32 %v1817, %v1889
    %v1891 = vpop.f32.mrb[0].mxu0
    %v1892 = vadd.f32 %v1819, %v1891
    %1893 = vmatprep.mubr.bf16.mxu0 %v128
    %1894 = vmatmul.mubr.bf16.gmra.mrb[0].mxu0 %v127
    %v1895 = vpop.f32.mrb[0].mxu0
    %v1896 = vadd.f32 %v1823, %v1895
    %v1897 = vpop.f32.mrb[0].mxu0
    %v1898 = vadd.f32 %v1825, %v1897
    %v1899 = vpop.f32.mrb[0].mxu0
    %v1900 = vadd.f32 %v1827, %v1899
    %v1901 = vpop.f32.mrb[0].mxu0
    %v1902 = vadd.f32 %v1829, %v1901
    %1903 = vmatprep.mubr.bf16.mxu0 %v136
    %1904 = vmatmul.mubr.bf16.gmra.mrb[0].mxu0 %v135
    %v1905 = vpop.f32.mrb[0].mxu0
    %v1906 = vadd.f32 %v1833, %v1905
    %v1907 = vpop.f32.mrb[0].mxu0
    %v1908 = vadd.f32 %v1835, %v1907
    %v1909 = vpop.f32.mrb[0].mxu0
    %v1910 = vadd.f32 %v1837, %v1909
    %v1911 = vpop.f32.mrb[0].mxu0
    %v1912 = vadd.f32 %v1839, %v1911
    %1913 = vmatprep.mubr.bf16.mxu0 %v144
    %1914 = vmatmul.mubr.bf16.gmra.mrb[0].mxu0 %v143
    %v1915 = vpop.f32.mrb[0].mxu0
    %v1916 = vadd.f32 %v1843, %v1915
    %v1917 = vpop.f32.mrb[0].mxu0
    %v1918 = vadd.f32 %v1845, %v1917
    %v1919 = vpop.f32.mrb[0].mxu0
    %v1920 = vadd.f32 %v1847, %v1919
    %v1921 = vpop.f32.mrb[0].mxu0
    %v1922 = vadd.f32 %v1849, %v1921
    %1923 = vdwg.mxu0
    %1924 = vmatprep.subr.bf16.mxu0 %v1386
    %1925 = vmatpush1.bf16.msra.mxu0 %v1385
    %1926 = vmatprep.subr.bf16.mxu0 %v1390
    %1927 = vmatpush1.bf16.msra.mxu0 %v1389
    %1928 = vmatprep.subr.bf16.mxu0 %v1394
    %1929 = vmatpush1.bf16.msra.mxu0 %v1393
    %1930 = vmatprep.subr.bf16.mxu0 %v1398
    %1931 = vmatpush1.bf16.msra.mxu0 %v1397
    %1932 = vmatprep.subr.bf16.mxu0 %v1402
    %1933 = vmatpush1.bf16.msra.mxu0 %v1401
    %1934 = vmatprep.subr.bf16.mxu0 %v1406
    %1935 = vmatpush1.bf16.msra.mxu0 %v1405
    %1936 = vmatprep.subr.bf16.mxu0 %v1410
    %1937 = vmatpush1.bf16.msra.mxu0 %v1409
    %1938 = vmatprep.subr.bf16.mxu0 %v1414
    %1939 = vmatpush1.bf16.msra.mxu0 %v1413
    %1940 = vmatprep.subr.bf16.mxu0 %v1418
    %1941 = vmatpush1.bf16.msra.mxu0 %v1417
    %1942 = vmatprep.subr.bf16.mxu0 %v1422
    %1943 = vmatpush1.bf16.msra.mxu0 %v1421
    %1944 = vmatprep.subr.bf16.mxu0 %v1426
    %1945 = vmatpush1.bf16.msra.mxu0 %v1425
    %1946 = vmatprep.subr.bf16.mxu0 %v1430
    %1947 = vmatpush1.bf16.msra.mxu0 %v1429
    %1948 = vmatprep.subr.bf16.mxu0 %v1434
    %1949 = vmatpush1.bf16.msra.mxu0 %v1433
    %1950 = vmatprep.subr.bf16.mxu0 %v1438
    %1951 = vmatpush1.bf16.msra.mxu0 %v1437
    %1952 = vmatprep.subr.bf16.mxu0 %v1442
    %1953 = vmatpush1.bf16.msra.mxu0 %v1441
    %1954 = vmatprep.subr.bf16.mxu0 %v1446
    %1955 = vmatpush1.bf16.msra.mxu0 %v1445
    %1956 = vmatprep.mubr.bf16.mxu0 %v122
    %1957 = vmatmul.mubr.bf16.gmra.mrb[0].mxu0 %v121
    %v1958 = vpop.f32.mrb[0].mxu0
    %v1959 = vadd.f32 %v1886, %v1958
    %v1960 = vpop.f32.mrb[0].mxu0
    %v1961 = vadd.f32 %v1888, %v1960
    %v1962 = vpop.f32.mrb[0].mxu0
    %v1963 = vadd.f32 %v1890, %v1962
    %v1964 = vpop.f32.mrb[0].mxu0
    %v1965 = vadd.f32 %v1892, %v1964
    %1966 = vmatprep.mubr.bf16.mxu0 %v130
    %1967 = vmatmul.mubr.bf16.gmra.mrb[0].mxu0 %v129
    %v1968 = vpop.f32.mrb[0].mxu0
    %v1969 = vadd.f32 %v1896, %v1968
    %v1970 = vpop.f32.mrb[0].mxu0
    %v1971 = vadd.f32 %v1898, %v1970
    %v1972 = vpop.f32.mrb[0].mxu0
    %v1973 = vadd.f32 %v1900, %v1972
    %v1974 = vpop.f32.mrb[0].mxu0
    %v1975 = vadd.f32 %v1902, %v1974
    %1976 = vmatprep.mubr.bf16.mxu0 %v138
    %1977 = vmatmul.mubr.bf16.gmra.mrb[0].mxu0 %v137
    %v1978 = vpop.f32.mrb[0].mxu0
    %v1979 = vadd.f32 %v1906, %v1978
    %v1980 = vpop.f32.mrb[0].mxu0
    %v1981 = vadd.f32 %v1908, %v1980
    %v1982 = vpop.f32.mrb[0].mxu0
    %v1983 = vadd.f32 %v1910, %v1982
    %v1984 = vpop.f32.mrb[0].mxu0
    %v1985 = vadd.f32 %v1912, %v1984
    %1986 = vmatprep.mubr.bf16.mxu0 %v146
    %1987 = vmatmul.mubr.bf16.gmra.mrb[0].mxu0 %v145
    %v1988 = vpop.f32.mrb[0].mxu0
    %v1989 = vadd.f32 %v1916, %v1988
    %v1990 = vpop.f32.mrb[0].mxu0
    %v1991 = vadd.f32 %v1918, %v1990
    %v1992 = vpop.f32.mrb[0].mxu0
    %v1993 = vadd.f32 %v1920, %v1992
    %v1994 = vpop.f32.mrb[0].mxu0
    %v1995 = vadd.f32 %v1922, %v1994
    %1996 = vdwg.mxu0
    %1997 = vmatprep.subr.bf16.mxu0 %v1196
    %1998 = vmatpush1.bf16.msra.mxu0 %v1195
    %1999 = vmatprep.subr.bf16.mxu0 %v1200
    %2000 = vmatpush1.bf16.msra.mxu0 %v1199
    %2001 = vmatprep.subr.bf16.mxu0 %v1204
    %2002 = vmatpush1.bf16.msra.mxu0 %v1203
    %2003 = vmatprep.subr.bf16.mxu0 %v1208
    %2004 = vmatpush1.bf16.msra.mxu0 %v1207
    %2005 = vmatprep.subr.bf16.mxu0 %v1212
    %2006 = vmatpush1.bf16.msra.mxu0 %v1211
    %2007 = vmatprep.subr.bf16.mxu0 %v1216
    %2008 = vmatpush1.bf16.msra.mxu0 %v1215
    %2009 = vmatprep.subr.bf16.mxu0 %v1220
    %2010 = vmatpush1.bf16.msra.mxu0 %v1219
    %2011 = vmatprep.subr.bf16.mxu0 %v1224
    %2012 = vmatpush1.bf16.msra.mxu0 %v1223
    %2013 = vmatprep.subr.bf16.mxu0 %v1228
    %2014 = vmatpush1.bf16.msra.mxu0 %v1227
    %2015 = vmatprep.subr.bf16.mxu0 %v1232
    %2016 = vmatpush1.bf16.msra.mxu0 %v1231
    %2017 = vmatprep.subr.bf16.mxu0 %v1236
    %2018 = vmatpush1.bf16.msra.mxu0 %v1235
    %2019 = vmatprep.subr.bf16.mxu0 %v1240
    %2020 = vmatpush1.bf16.msra.mxu0 %v1239
    %2021 = vmatprep.subr.bf16.mxu0 %v1244
    %2022 = vmatpush1.bf16.msra.mxu0 %v1243
    %2023 = vmatprep.subr.bf16.mxu0 %v1248
    %2024 = vmatpush1.bf16.msra.mxu0 %v1247
    %2025 = vmatprep.subr.bf16.mxu0 %v1252
    %2026 = vmatpush1.bf16.msra.mxu0 %v1251
    %2027 = vmatprep.subr.bf16.mxu0 %v1256
    %2028 = vmatpush1.bf16.msra.mxu0 %v1255
    %2029 = vmatprep.mubr.bf16.mxu0 %v116
    %2030 = vmatmul.mubr.bf16.gmra.mrb[0].mxu0 %v115
    %v2031 = vpop.f32.mrb[0].mxu0
    %v2032 = vadd.f32 %v416, %v2031
    %v2033 = vpop.f32.mrb[0].mxu0
    %v2034 = vadd.f32 %v420, %v2033
    %v2035 = vpop.f32.mrb[0].mxu0
    %v2036 = vadd.f32 %v416, %v2035
    %v2037 = vpop.f32.mrb[0].mxu0
    %v2038 = vadd.f32 %v420, %v2037
    %2039 = vmatprep.mubr.bf16.mxu0 %v124
    %2040 = vmatmul.mubr.bf16.gmra.mrb[0].mxu0 %v123
    %v2041 = vpop.f32.mrb[0].mxu0
    %v2042 = vadd.f32 %v416, %v2041
    %v2043 = vpop.f32.mrb[0].mxu0
    %v2044 = vadd.f32 %v420, %v2043
    %v2045 = vpop.f32.mrb[0].mxu0
    %v2046 = vadd.f32 %v416, %v2045
    %v2047 = vpop.f32.mrb[0].mxu0
    %v2048 = vadd.f32 %v420, %v2047
    %2049 = vmatprep.mubr.bf16.mxu0 %v132
    %2050 = vmatmul.mubr.bf16.gmra.mrb[0].mxu0 %v131
    %v2051 = vpop.f32.mrb[0].mxu0
    %v2052 = vadd.f32 %v416, %v2051
    %v2053 = vpop.f32.mrb[0].mxu0
    %v2054 = vadd.f32 %v420, %v2053
    %v2055 = vpop.f32.mrb[0].mxu0
    %v2056 = vadd.f32 %v416, %v2055
    %v2057 = vpop.f32.mrb[0].mxu0
    %v2058 = vadd.f32 %v420, %v2057
    %2059 = vmatprep.mubr.bf16.mxu0 %v140
    %2060 = vmatmul.mubr.bf16.gmra.mrb[0].mxu0 %v139
    %v2061 = vpop.f32.mrb[0].mxu0
    %v2062 = vadd.f32 %v416, %v2061
    %v2063 = vpop.f32.mrb[0].mxu0
    %v2064 = vadd.f32 %v420, %v2063
    %v2065 = vpop.f32.mrb[0].mxu0
    %v2066 = vadd.f32 %v416, %v2065
    %v2067 = vpop.f32.mrb[0].mxu0
    %v2068 = vadd.f32 %v420, %v2067
    %2069 = vdwg.mxu0
    %2070 = vmatprep.subr.bf16.mxu0 %v1260
    %2071 = vmatpush1.bf16.msra.mxu0 %v1259
    %2072 = vmatprep.subr.bf16.mxu0 %v1264
    %2073 = vmatpush1.bf16.msra.mxu0 %v1263
    %2074 = vmatprep.subr.bf16.mxu0 %v1268
    %2075 = vmatpush1.bf16.msra.mxu0 %v1267
    %2076 = vmatprep.subr.bf16.mxu0 %v1272
    %2077 = vmatpush1.bf16.msra.mxu0 %v1271
    %2078 = vmatprep.subr.bf16.mxu0 %v1276
    %2079 = vmatpush1.bf16.msra.mxu0 %v1275
    %2080 = vmatprep.subr.bf16.mxu0 %v1280
    %2081 = vmatpush1.bf16.msra.mxu0 %v1279
    %2082 = vmatprep.subr.bf16.mxu0 %v1284
    %2083 = vmatpush1.bf16.msra.mxu0 %v1283
    %2084 = vmatprep.subr.bf16.mxu0 %v1288
    %2085 = vmatpush1.bf16.msra.mxu0 %v1287
    %2086 = vmatprep.subr.bf16.mxu0 %v1292
    %2087 = vmatpush1.bf16.msra.mxu0 %v1291
    %2088 = vmatprep.subr.bf16.mxu0 %v1296
    %2089 = vmatpush1.bf16.msra.mxu0 %v1295
    %2090 = vmatprep.subr.bf16.mxu0 %v1300
    %2091 = vmatpush1.bf16.msra.mxu0 %v1299
    %2092 = vmatprep.subr.bf16.mxu0 %v1304
    %2093 = vmatpush1.bf16.msra.mxu0 %v1303
    %2094 = vmatprep.subr.bf16.mxu0 %v1308
    %2095 = vmatpush1.bf16.msra.mxu0 %v1307
    %2096 = vmatprep.subr.bf16.mxu0 %v1312
    %2097 = vmatpush1.bf16.msra.mxu0 %v1311
    %2098 = vmatprep.subr.bf16.mxu0 %v1316
    %2099 = vmatpush1.bf16.msra.mxu0 %v1315
    %2100 = vmatprep.subr.bf16.mxu0 %v1320
    %2101 = vmatpush1.bf16.msra.mxu0 %v1319
    %2102 = vmatprep.mubr.bf16.mxu0 %v118
    %2103 = vmatmul.mubr.bf16.gmra.mrb[0].mxu0 %v117
    %v2104 = vpop.f32.mrb[0].mxu0
    %v2105 = vadd.f32 %v2032, %v2104
    %v2106 = vpop.f32.mrb[0].mxu0
    %v2107 = vadd.f32 %v2034, %v2106
    %v2108 = vpop.f32.mrb[0].mxu0
    %v2109 = vadd.f32 %v2036, %v2108
    %v2110 = vpop.f32.mrb[0].mxu0
    %v2111 = vadd.f32 %v2038, %v2110
    %2112 = vmatprep.mubr.bf16.mxu0 %v126
    %2113 = vmatmul.mubr.bf16.gmra.mrb[0].mxu0 %v125
    %v2114 = vpop.f32.mrb[0].mxu0
    %v2115 = vadd.f32 %v2042, %v2114
    %v2116 = vpop.f32.mrb[0].mxu0
    %v2117 = vadd.f32 %v2044, %v2116
    %v2118 = vpop.f32.mrb[0].mxu0
    %v2119 = vadd.f32 %v2046, %v2118
    %v2120 = vpop.f32.mrb[0].mxu0
    %v2121 = vadd.f32 %v2048, %v2120
    %2122 = vmatprep.mubr.bf16.mxu0 %v134
    %2123 = vmatmul.mubr.bf16.gmra.mrb[0].mxu0 %v133
    %v2124 = vpop.f32.mrb[0].mxu0
    %v2125 = vadd.f32 %v2052, %v2124
    %v2126 = vpop.f32.mrb[0].mxu0
    %v2127 = vadd.f32 %v2054, %v2126
    %v2128 = vpop.f32.mrb[0].mxu0
    %v2129 = vadd.f32 %v2056, %v2128
    %v2130 = vpop.f32.mrb[0].mxu0
    %v2131 = vadd.f32 %v2058, %v2130
    %2132 = vmatprep.mubr.bf16.mxu0 %v142
    %2133 = vmatmul.mubr.bf16.gmra.mrb[0].mxu0 %v141
    %v2134 = vpop.f32.mrb[0].mxu0
    %v2135 = vadd.f32 %v2062, %v2134
    %v2136 = vpop.f32.mrb[0].mxu0
    %v2137 = vadd.f32 %v2064, %v2136
    %v2138 = vpop.f32.mrb[0].mxu0
    %v2139 = vadd.f32 %v2066, %v2138
    %v2140 = vpop.f32.mrb[0].mxu0
    %v2141 = vadd.f32 %v2068, %v2140
    %2142 = vdwg.mxu0
    %2143 = vmatprep.subr.bf16.mxu0 %v1324
    %2144 = vmatpush1.bf16.msra.mxu0 %v1323
    %2145 = vmatprep.subr.bf16.mxu0 %v1328
    %2146 = vmatpush1.bf16.msra.mxu0 %v1327
    %2147 = vmatprep.subr.bf16.mxu0 %v1332
    %2148 = vmatpush1.bf16.msra.mxu0 %v1331
    %2149 = vmatprep.subr.bf16.mxu0 %v1336
    %2150 = vmatpush1.bf16.msra.mxu0 %v1335
    %2151 = vmatprep.subr.bf16.mxu0 %v1340
    %2152 = vmatpush1.bf16.msra.mxu0 %v1339
    %2153 = vmatprep.subr.bf16.mxu0 %v1344
    %2154 = vmatpush1.bf16.msra.mxu0 %v1343
    %2155 = vmatprep.subr.bf16.mxu0 %v1348
    %2156 = vmatpush1.bf16.msra.mxu0 %v1347
    %2157 = vmatprep.subr.bf16.mxu0 %v1352
    %2158 = vmatpush1.bf16.msra.mxu0 %v1351
    %2159 = vmatprep.subr.bf16.mxu0 %v1356
    %2160 = vmatpush1.bf16.msra.mxu0 %v1355
    %2161 = vmatprep.subr.bf16.mxu0 %v1360
    %2162 = vmatpush1.bf16.msra.mxu0 %v1359
    %2163 = vmatprep.subr.bf16.mxu0 %v1364
    %2164 = vmatpush1.bf16.msra.mxu0 %v1363
    %2165 = vmatprep.subr.bf16.mxu0 %v1368
    %2166 = vmatpush1.bf16.msra.mxu0 %v1367
    %2167 = vmatprep.subr.bf16.mxu0 %v1372
    %2168 = vmatpush1.bf16.msra.mxu0 %v1371
    %2169 = vmatprep.subr.bf16.mxu0 %v1376
    %2170 = vmatpush1.bf16.msra.mxu0 %v1375
    %2171 = vmatprep.subr.bf16.mxu0 %v1380
    %2172 = vmatpush1.bf16.msra.mxu0 %v1379
    %2173 = vmatprep.subr.bf16.mxu0 %v1384
    %2174 = vmatpush1.bf16.msra.mxu0 %v1383
    %2175 = vmatprep.mubr.bf16.mxu0 %v120
    %2176 = vmatmul.mubr.bf16.gmra.mrb[0].mxu0 %v119
    %v2177 = vpop.f32.mrb[0].mxu0
    %v2178 = vadd.f32 %v2105, %v2177
    %v2179 = vpop.f32.mrb[0].mxu0
    %v2180 = vadd.f32 %v2107, %v2179
    %v2181 = vpop.f32.mrb[0].mxu0
    %v2182 = vadd.f32 %v2109, %v2181
    %v2183 = vpop.f32.mrb[0].mxu0
    %v2184 = vadd.f32 %v2111, %v2183
    %2185 = vmatprep.mubr.bf16.mxu0 %v128
    %2186 = vmatmul.mubr.bf16.gmra.mrb[0].mxu0 %v127
    %v2187 = vpop.f32.mrb[0].mxu0
    %v2188 = vadd.f32 %v2115, %v2187
    %v2189 = vpop.f32.mrb[0].mxu0
    %v2190 = vadd.f32 %v2117, %v2189
    %v2191 = vpop.f32.mrb[0].mxu0
    %v2192 = vadd.f32 %v2119, %v2191
    %v2193 = vpop.f32.mrb[0].mxu0
    %v2194 = vadd.f32 %v2121, %v2193
    %2195 = vmatprep.mubr.bf16.mxu0 %v136
    %2196 = vmatmul.mubr.bf16.gmra.mrb[0].mxu0 %v135
    %v2197 = vpop.f32.mrb[0].mxu0
    %v2198 = vadd.f32 %v2125, %v2197
    %v2199 = vpop.f32.mrb[0].mxu0
    %v2200 = vadd.f32 %v2127, %v2199
    %v2201 = vpop.f32.mrb[0].mxu0
    %v2202 = vadd.f32 %v2129, %v2201
    %v2203 = vpop.f32.mrb[0].mxu0
    %v2204 = vadd.f32 %v2131, %v2203
    %2205 = vmatprep.mubr.bf16.mxu0 %v144
    %2206 = vmatmul.mubr.bf16.gmra.mrb[0].mxu0 %v143
    %v2207 = vpop.f32.mrb[0].mxu0
    %v2208 = vadd.f32 %v2135, %v2207
    %v2209 = vpop.f32.mrb[0].mxu0
    %v2210 = vadd.f32 %v2137, %v2209
    %v2211 = vpop.f32.mrb[0].mxu0
    %v2212 = vadd.f32 %v2139, %v2211
    %v2213 = vpop.f32.mrb[0].mxu0
    %v2214 = vadd.f32 %v2141, %v2213
    %2215 = vdwg.mxu0
    %2216 = vmatprep.subr.bf16.mxu0 %v1388
    %2217 = vmatpush1.bf16.msra.mxu0 %v1387
    %2218 = vmatprep.subr.bf16.mxu0 %v1392
    %2219 = vmatpush1.bf16.msra.mxu0 %v1391
    %2220 = vmatprep.subr.bf16.mxu0 %v1396
    %2221 = vmatpush1.bf16.msra.mxu0 %v1395
    %2222 = vmatprep.subr.bf16.mxu0 %v1400
    %2223 = vmatpush1.bf16.msra.mxu0 %v1399
    %2224 = vmatprep.subr.bf16.mxu0 %v1404
    %2225 = vmatpush1.bf16.msra.mxu0 %v1403
    %2226 = vmatprep.subr.bf16.mxu0 %v1408
    %2227 = vmatpush1.bf16.msra.mxu0 %v1407
    %2228 = vmatprep.subr.bf16.mxu0 %v1412
    %2229 = vmatpush1.bf16.msra.mxu0 %v1411
    %2230 = vmatprep.subr.bf16.mxu0 %v1416
    %2231 = vmatpush1.bf16.msra.mxu0 %v1415
    %2232 = vmatprep.subr.bf16.mxu0 %v1420
    %2233 = vmatpush1.bf16.msra.mxu0 %v1419
    %2234 = vmatprep.subr.bf16.mxu0 %v1424
    %2235 = vmatpush1.bf16.msra.mxu0 %v1423
    %2236 = vmatprep.subr.bf16.mxu0 %v1428
    %2237 = vmatpush1.bf16.msra.mxu0 %v1427
    %2238 = vmatprep.subr.bf16.mxu0 %v1432
    %2239 = vmatpush1.bf16.msra.mxu0 %v1431
    %2240 = vmatprep.subr.bf16.mxu0 %v1436
    %2241 = vmatpush1.bf16.msra.mxu0 %v1435
    %2242 = vmatprep.subr.bf16.mxu0 %v1440
    %2243 = vmatpush1.bf16.msra.mxu0 %v1439
    %2244 = vmatprep.subr.bf16.mxu0 %v1444
    %2245 = vmatpush1.bf16.msra.mxu0 %v1443
    %2246 = vmatprep.subr.bf16.mxu0 %v1448
    %2247 = vmatpush1.bf16.msra.mxu0 %v1447
    %2248 = vmatprep.mubr.bf16.mxu0 %v122
    %2249 = vmatmul.mubr.bf16.gmra.mrb[0].mxu0 %v121
    %v2250 = vpop.f32.mrb[0].mxu0
    %v2251 = vadd.f32 %v2178, %v2250
    %v2252 = vpop.f32.mrb[0].mxu0
    %v2253 = vadd.f32 %v2180, %v2252
    %v2254 = vpop.f32.mrb[0].mxu0
    %v2255 = vadd.f32 %v2182, %v2254
    %v2256 = vpop.f32.mrb[0].mxu0
    %v2257 = vadd.f32 %v2184, %v2256
    %2258 = vmatprep.mubr.bf16.mxu0 %v130
    %2259 = vmatmul.mubr.bf16.gmra.mrb[0].mxu0 %v129
    %v2260 = vpop.f32.mrb[0].mxu0
    %v2261 = vadd.f32 %v2188, %v2260
    %v2262 = vpop.f32.mrb[0].mxu0
    %v2263 = vadd.f32 %v2190, %v2262
    %v2264 = vpop.f32.mrb[0].mxu0
    %v2265 = vadd.f32 %v2192, %v2264
    %v2266 = vpop.f32.mrb[0].mxu0
    %v2267 = vadd.f32 %v2194, %v2266
    %2268 = vmatprep.mubr.bf16.mxu0 %v138
    %2269 = vmatmul.mubr.bf16.gmra.mrb[0].mxu0 %v137
    %v2270 = vpop.f32.mrb[0].mxu0
    %v2271 = vadd.f32 %v2198, %v2270
    %v2272 = vpop.f32.mrb[0].mxu0
    %v2273 = vadd.f32 %v2200, %v2272
    %v2274 = vpop.f32.mrb[0].mxu0
    %v2275 = vadd.f32 %v2202, %v2274
    %v2276 = vpop.f32.mrb[0].mxu0
    %v2277 = vadd.f32 %v2204, %v2276
    %2278 = vmatprep.mubr.bf16.mxu0 %v146
    %2279 = vmatmul.mubr.bf16.gmra.mrb[0].mxu0 %v145
    %v2280 = vpop.f32.mrb[0].mxu0
    %v2281 = vadd.f32 %v2208, %v2280
    %v2282 = vpop.f32.mrb[0].mxu0
    %v2283 = vadd.f32 %v2210, %v2282
    %v2284 = vpop.f32.mrb[0].mxu0
    %v2285 = vadd.f32 %v2212, %v2284
    %v2286 = vpop.f32.mrb[0].mxu0
    %v2287 = vadd.f32 %v2214, %v2286
    %2288 = vdwg.mxu0
    %v2289 = vtanh.pop %v1959
    %v2290 = vtanh.pop %v1961
    %v2291 = vtanh.pop %v2251
    %v2292 = vtanh.pop %v2253
    %v2293 = vtanh.pop %v1963
    %v2294 = vtanh.pop %v1965
    %v2295 = vtanh.pop %v2255
    %v2296 = vtanh.pop %v2257
    %v2297 = vtanh.pop %v1969
    %v2298 = vtanh.pop %v1971
    %v2299 = vtanh.pop %v2261
    %v2300 = vtanh.pop %v2263
    %v2301 = vtanh.pop %v1973
    %v2302 = vtanh.pop %v1975
    %v2303 = vtanh.pop %v2265
    %v2304 = vtanh.pop %v2267
    %v2305 = vtanh.pop %v1979
    %v2306 = vtanh.pop %v1981
    %v2307 = vtanh.pop %v2271
    %v2308 = vtanh.pop %v2273
    %v2309 = vtanh.pop %v1983
    %v2310 = vtanh.pop %v1985
    %v2311 = vtanh.pop %v2275
    %v2312 = vtanh.pop %v2277
    %v2313 = vtanh.pop %v1989
    %v2314 = vtanh.pop %v1991
    %v2315 = vtanh.pop %v2281
    %v2316 = vtanh.pop %v2283
    %v2317 = vtanh.pop %v1993
    %v2318 = vtanh.pop %v1995
    %v2319 = vtanh.pop %v2285
    %v2320 = vtanh.pop %v2287
    %v2321 = vld [vmem:[%s3] sm:$0xf]
    %v2323 = vlaneseq
    %v2324 = vshrl.u32 %v2323, 7
    %v2325 = vsub.s32 0, %v2324
    %v2326 = vrot.slane %v2321, %v2325
    %v2327 = vlaneseq
    %v2328 = vshrl.u32 %v2327, 7
    %v2329 = vsub.s32 1, %v2328
    %v2330 = vrot.slane %v2321, %v2329
    %v2331 = vlaneseq
    %v2332 = vshrl.u32 %v2331, 7
    %v2333 = vsub.s32 2, %v2332
    %v2334 = vrot.slane %v2321, %v2333
    %v2335 = vlaneseq
    %v2336 = vshrl.u32 %v2335, 7
    %v2337 = vsub.s32 3, %v2336
    %v2338 = vrot.slane %v2321, %v2337
    %v2343 = vmul.f32 %v2289, %v2326
    %v2344 = vmul.f32 %v2290, %v2330
    %v2345 = vmul.f32 %v2291, %v2334
    %v2346 = vmul.f32 %v2292, %v2338
    %v2347 = vmul.f32 %v2293, %v2326
    %v2348 = vmul.f32 %v2294, %v2330
    %v2349 = vmul.f32 %v2295, %v2334
    %v2350 = vmul.f32 %v2296, %v2338
    %v2351 = vmul.f32 %v2297, %v2326
    %v2352 = vmul.f32 %v2298, %v2330
    %v2353 = vmul.f32 %v2299, %v2334
    %v2354 = vmul.f32 %v2300, %v2338
    %v2355 = vmul.f32 %v2301, %v2326
    %v2356 = vmul.f32 %v2302, %v2330
    %v2357 = vmul.f32 %v2303, %v2334
    %v2358 = vmul.f32 %v2304, %v2338
    %v2359 = vmul.f32 %v2305, %v2326
    %v2360 = vmul.f32 %v2306, %v2330
    %v2361 = vmul.f32 %v2307, %v2334
    %v2362 = vmul.f32 %v2308, %v2338
    %v2363 = vmul.f32 %v2309, %v2326
    %v2364 = vmul.f32 %v2310, %v2330
    %v2365 = vmul.f32 %v2311, %v2334
    %v2366 = vmul.f32 %v2312, %v2338
    %v2367 = vmul.f32 %v2313, %v2326
    %v2368 = vmul.f32 %v2314, %v2330
    %v2369 = vmul.f32 %v2315, %v2334
    %v2370 = vmul.f32 %v2316, %v2338
    %v2371 = vmul.f32 %v2317, %v2326
    %v2372 = vmul.f32 %v2318, %v2330
    %v2373 = vmul.f32 %v2319, %v2334
    %v2374 = vmul.f32 %v2320, %v2338
    %v2375 = vadd.f32 %v2343, %v2344
    %v2376 = vadd.f32 %v2375, %v2345
    %v2377 = vadd.f32 %v2376, %v2346
    %2378 = vadd.xlane.f32.xlu0 %v2377
    %v2379 = vpop.xlane.xlu0 %2378
    %v2380 = vadd.f32 %v2347, %v2348
    %v2381 = vadd.f32 %v2380, %v2349
    %v2382 = vadd.f32 %v2381, %v2350
    %2383 = vadd.xlane.f32.xlu0 %v2382
    %v2384 = vpop.xlane.xlu0 %2383
    %v2385 = vadd.f32 %v2351, %v2352
    %v2386 = vadd.f32 %v2385, %v2353
    %v2387 = vadd.f32 %v2386, %v2354
    %2388 = vadd.xlane.f32.xlu0 %v2387
    %v2389 = vpop.xlane.xlu0 %2388
    %v2390 = vadd.f32 %v2355, %v2356
    %v2391 = vadd.f32 %v2390, %v2357
    %v2392 = vadd.f32 %v2391, %v2358
    %2393 = vadd.xlane.f32.xlu0 %v2392
    %v2394 = vpop.xlane.xlu0 %2393
    %v2395 = vadd.f32 %v2359, %v2360
    %v2396 = vadd.f32 %v2395, %v2361
    %v2397 = vadd.f32 %v2396, %v2362
    %2398 = vadd.xlane.f32.xlu0 %v2397
    %v2399 = vpop.xlane.xlu0 %2398
    %v2400 = vadd.f32 %v2363, %v2364
    %v2401 = vadd.f32 %v2400, %v2365
    %v2402 = vadd.f32 %v2401, %v2366
    %2403 = vadd.xlane.f32.xlu0 %v2402
    %v2404 = vpop.xlane.xlu0 %2403
    %v2405 = vadd.f32 %v2367, %v2368
    %v2406 = vadd.f32 %v2405, %v2369
    %v2407 = vadd.f32 %v2406, %v2370
    %2408 = vadd.xlane.f32.xlu0 %v2407
    %v2409 = vpop.xlane.xlu0 %2408
    %v2410 = vadd.f32 %v2371, %v2372
    %v2411 = vadd.f32 %v2410, %v2373
    %v2412 = vadd.f32 %v2411, %v2374
    %2413 = vadd.xlane.f32.xlu0 %v2412
    %v2414 = vpop.xlane.xlu0 %2413
    %v2415 = vld [vmem:[#allocation2] sm:$0x1]
    %v2417 = vlaneseq
    %v2418 = vshrl.u32 %v2417, 7
    %v2419 = vsub.s32 0, %v2418
    %v2420 = vrot.slane %v2415, %v2419
    %2421 = vset.pattern.permute.xlu0 0
    %2422 = vperm.xlu0 %2421, %v2420
    %v2423 = vpop.permute.xlu0 %2422
    %v2425 = vadd.f32 %v2379, %v2423
    %v2426 = vadd.f32 %v2384, %v2423
    %v2427 = vadd.f32 %v2389, %v2423
    %v2428 = vadd.f32 %v2394, %v2423
    %v2429 = vadd.f32 %v2399, %v2423
    %v2430 = vadd.f32 %v2404, %v2423
    %v2431 = vadd.f32 %v2409, %v2423
    %v2432 = vadd.f32 %v2414, %v2423
    %v2441 = vlaneseq
    %v2442 = vand.u32 %v2441, 127
    %v2443 = vlaneseq
    %v2444 = vshrl.u32 %v2443, 7
    %v2445 = vsub.s32 %v2442, %v2444
    %v2446 = vrot.slane %v2425, %v2445
    %v2447 = vlaneseq
    %v2448 = vshrl.u32 %v2447, 7
    %v2449 = vsub.s32 %v2442, %v2448
    %v2450 = vrot.slane %v2426, %v2449
    %v2451 = vlaneseq
    %v2452 = vshrl.u32 %v2451, 7
    %v2453 = vsub.s32 %v2442, %v2452
    %v2454 = vrot.slane %v2427, %v2453
    %v2455 = vlaneseq
    %v2456 = vshrl.u32 %v2455, 7
    %v2457 = vsub.s32 %v2442, %v2456
    %v2458 = vrot.slane %v2428, %v2457
    %v2459 = vlaneseq
    %v2460 = vshrl.u32 %v2459, 7
    %v2461 = vsub.s32 %v2442, %v2460
    %v2462 = vrot.slane %v2429, %v2461
    %v2463 = vlaneseq
    %v2464 = vshrl.u32 %v2463, 7
    %v2465 = vsub.s32 %v2442, %v2464
    %v2466 = vrot.slane %v2430, %v2465
    %v2467 = vlaneseq
    %v2468 = vshrl.u32 %v2467, 7
    %v2469 = vsub.s32 %v2442, %v2468
    %v2470 = vrot.slane %v2431, %v2469
    %v2471 = vlaneseq
    %v2472 = vshrl.u32 %v2471, 7
    %v2473 = vsub.s32 %v2442, %v2472
    %v2474 = vrot.slane %v2432, %v2473
    %vm2475 = vcmask 1041409
    %v2476 = vsel %vm2475, %v2450, %v2446
    %vm2477 = vcmask 1042434
    %v2478 = vsel %vm2477, %v2454, %v2476
    %vm2479 = vcmask 1043459
    %v2480 = vsel %vm2479, %v2458, %v2478
    %vm2481 = vcmask 1044484
    %v2482 = vsel %vm2481, %v2462, %v2480
    %vm2483 = vcmask 1045509
    %v2484 = vsel %vm2483, %v2466, %v2482
    %vm2485 = vcmask 1046534
    %v2486 = vsel %vm2485, %v2470, %v2484
    %vm2487 = vcmask 1047559
    %v2488 = vsel %vm2487, %v2474, %v2486
    %vm2490 = vcmask 64512
    %v2491 = vsel %vm2490, %v2488, -inf
    %2492 = vmax.xlane.f32.xlu0 %v2491
    %v2493 = vpop.xlane.xlu0 %2492
    %v2495 = vlaneseq
    %v2496 = vshrl.u32 %v2495, 7
    %v2497 = vsub.s32 0, %v2496
    %v2498 = vrot.slane %v2493, %v2497
    %v2499 = vlaneseq
    %v2500 = vshrl.u32 %v2499, 7
    %v2501 = vsub.s32 1, %v2500
    %v2502 = vrot.slane %v2493, %v2501
    %v2503 = vlaneseq
    %v2504 = vshrl.u32 %v2503, 7
    %v2505 = vsub.s32 2, %v2504
    %v2506 = vrot.slane %v2493, %v2505
    %v2507 = vlaneseq
    %v2508 = vshrl.u32 %v2507, 7
    %v2509 = vsub.s32 3, %v2508
    %v2510 = vrot.slane %v2493, %v2509
    %v2511 = vlaneseq
    %v2512 = vshrl.u32 %v2511, 7
    %v2513 = vsub.s32 4, %v2512
    %v2514 = vrot.slane %v2493, %v2513
    %v2515 = vlaneseq
    %v2516 = vshrl.u32 %v2515, 7
    %v2517 = vsub.s32 5, %v2516
    %v2518 = vrot.slane %v2493, %v2517
    %v2519 = vlaneseq
    %v2520 = vshrl.u32 %v2519, 7
    %v2521 = vsub.s32 6, %v2520
    %v2522 = vrot.slane %v2493, %v2521
    %v2523 = vlaneseq
    %v2524 = vshrl.u32 %v2523, 7
    %v2525 = vsub.s32 7, %v2524
    %v2526 = vrot.slane %v2493, %v2525
    %v2535 = vsub.f32 %v2425, %v2498
    %v2536 = vsub.f32 %v2426, %v2502
    %v2537 = vsub.f32 %v2427, %v2506
    %v2538 = vsub.f32 %v2428, %v2510
    %v2539 = vsub.f32 %v2429, %v2514
    %v2540 = vsub.f32 %v2430, %v2518
    %v2541 = vsub.f32 %v2431, %v2522
    %v2542 = vsub.f32 %v2432, %v2526
    %v2543 = vmul.f32 %v2535, 1.442695
    %v2544 = vpow.pop %v2543
    %v2545 = vmul.f32 %v2536, 1.442695
    %v2546 = vpow.pop %v2545
    %v2547 = vmul.f32 %v2537, 1.442695
    %v2548 = vpow.pop %v2547
    %v2549 = vmul.f32 %v2538, 1.442695
    %v2550 = vpow.pop %v2549
    %v2551 = vmul.f32 %v2539, 1.442695
    %v2552 = vpow.pop %v2551
    %v2553 = vmul.f32 %v2540, 1.442695
    %v2554 = vpow.pop %v2553
    %v2555 = vmul.f32 %v2541, 1.442695
    %v2556 = vpow.pop %v2555
    %v2557 = vmul.f32 %v2542, 1.442695
    %v2558 = vpow.pop %v2557
    %2567 = vset.pattern.permute.xlu0 0
    %2568 = vperm.xlu0 %2567, %v2544
    %v2569 = vpop.permute.xlu0 %2568
    %2570 = vset.pattern.permute.xlu0 0
    %2571 = vperm.xlu0 %2570, %v2546
    %v2572 = vpop.permute.xlu0 %2571
    %2573 = vset.pattern.permute.xlu0 0
    %2574 = vperm.xlu0 %2573, %v2548
    %v2575 = vpop.permute.xlu0 %2574
    %2576 = vset.pattern.permute.xlu0 0
    %2577 = vperm.xlu0 %2576, %v2550
    %v2578 = vpop.permute.xlu0 %2577
    %2579 = vset.pattern.permute.xlu0 0
    %2580 = vperm.xlu0 %2579, %v2552
    %v2581 = vpop.permute.xlu0 %2580
    %2582 = vset.pattern.permute.xlu0 0
    %2583 = vperm.xlu0 %2582, %v2554
    %v2584 = vpop.permute.xlu0 %2583
    %2585 = vset.pattern.permute.xlu0 0
    %2586 = vperm.xlu0 %2585, %v2556
    %v2587 = vpop.permute.xlu0 %2586
    %2588 = vset.pattern.permute.xlu0 0
    %2589 = vperm.xlu0 %2588, %v2558
    %v2590 = vpop.permute.xlu0 %2589
    %v2591 = vlaneseq
    %v2592 = vshrl.u32 %v2591, 7
    %v2593 = vsub.s32 %v2442, %v2592
    %v2594 = vrot.slane %v2569, %v2593
    %v2595 = vlaneseq
    %v2596 = vshrl.u32 %v2595, 7
    %v2597 = vsub.s32 %v2442, %v2596
    %v2598 = vrot.slane %v2572, %v2597
    %v2599 = vlaneseq
    %v2600 = vshrl.u32 %v2599, 7
    %v2601 = vsub.s32 %v2442, %v2600
    %v2602 = vrot.slane %v2575, %v2601
    %v2603 = vlaneseq
    %v2604 = vshrl.u32 %v2603, 7
    %v2605 = vsub.s32 %v2442, %v2604
    %v2606 = vrot.slane %v2578, %v2605
    %v2607 = vlaneseq
    %v2608 = vshrl.u32 %v2607, 7
    %v2609 = vsub.s32 %v2442, %v2608
    %v2610 = vrot.slane %v2581, %v2609
    %v2611 = vlaneseq
    %v2612 = vshrl.u32 %v2611, 7
    %v2613 = vsub.s32 %v2442, %v2612
    %v2614 = vrot.slane %v2584, %v2613
    %v2615 = vlaneseq
    %v2616 = vshrl.u32 %v2615, 7
    %v2617 = vsub.s32 %v2442, %v2616
    %v2618 = vrot.slane %v2587, %v2617
    %v2619 = vlaneseq
    %v2620 = vshrl.u32 %v2619, 7
    %v2621 = vsub.s32 %v2442, %v2620
    %v2622 = vrot.slane %v2590, %v2621
    %v2623 = vsel %vm2475, %v2598, %v2594
    %v2624 = vsel %vm2477, %v2602, %v2623
    %v2625 = vsel %vm2479, %v2606, %v2624
    %v2626 = vsel %vm2481, %v2610, %v2625
    %v2627 = vsel %vm2483, %v2614, %v2626
    %v2628 = vsel %vm2485, %v2618, %v2627
    %v2629 = vsel %vm2487, %v2622, %v2628
    %v2631 = vsel %vm2490, %v2629, 0.0
    %2632 = vadd.xlane.f32.xlu0 %v2631
    %v2633 = vpop.xlane.xlu0 %2632
    %v2635 = vlaneseq
    %v2636 = vshrl.u32 %v2635, 7
    %v2637 = vsub.s32 0, %v2636
    %v2638 = vrot.slane %v2633, %v2637
    %v2639 = vlaneseq
    %v2640 = vshrl.u32 %v2639, 7
    %v2641 = vsub.s32 1, %v2640
    %v2642 = vrot.slane %v2633, %v2641
    %v2643 = vlaneseq
    %v2644 = vshrl.u32 %v2643, 7
    %v2645 = vsub.s32 2, %v2644
    %v2646 = vrot.slane %v2633, %v2645
    %v2647 = vlaneseq
    %v2648 = vshrl.u32 %v2647, 7
    %v2649 = vsub.s32 3, %v2648
    %v2650 = vrot.slane %v2633, %v2649
    %v2651 = vlaneseq
    %v2652 = vshrl.u32 %v2651, 7
    %v2653 = vsub.s32 4, %v2652
    %v2654 = vrot.slane %v2633, %v2653
    %v2655 = vlaneseq
    %v2656 = vshrl.u32 %v2655, 7
    %v2657 = vsub.s32 5, %v2656
    %v2658 = vrot.slane %v2633, %v2657
    %v2659 = vlaneseq
    %v2660 = vshrl.u32 %v2659, 7
    %v2661 = vsub.s32 6, %v2660
    %v2662 = vrot.slane %v2633, %v2661
    %v2663 = vlaneseq
    %v2664 = vshrl.u32 %v2663, 7
    %v2665 = vsub.s32 7, %v2664
    %v2666 = vrot.slane %v2633, %v2665
    %v2675 = vrcp.pop %v2638
    %v2676 = vmul.f32 %v2544, %v2675
    %v2677 = vrcp.pop %v2642
    %v2678 = vmul.f32 %v2546, %v2677
    %v2679 = vrcp.pop %v2646
    %v2680 = vmul.f32 %v2548, %v2679
    %v2681 = vrcp.pop %v2650
    %v2682 = vmul.f32 %v2550, %v2681
    %v2683 = vrcp.pop %v2654
    %v2684 = vmul.f32 %v2552, %v2683
    %v2685 = vrcp.pop %v2658
    %v2686 = vmul.f32 %v2554, %v2685
    %v2687 = vrcp.pop %v2662
    %v2688 = vmul.f32 %v2556, %v2687
    %v2689 = vrcp.pop %v2666
    %v2690 = vmul.f32 %v2558, %v2689
    %2692 = vset.pattern.permute.xlu0 0
    %2693 = vperm.xlu0 %2692, %v2676
    %v2694 = vpop.permute.xlu0 %2693
    %2697 = vset.pattern.permute.xlu0 0
    %2698 = vperm.xlu0 %2697, %v2678
    %v2699 = vpop.permute.xlu0 %2698
    %2702 = vset.pattern.permute.xlu0 0
    %2703 = vperm.xlu0 %2702, %v2680
    %v2704 = vpop.permute.xlu0 %2703
    %2707 = vset.pattern.permute.xlu0 0
    %2708 = vperm.xlu0 %2707, %v2682
    %v2709 = vpop.permute.xlu0 %2708
    %2712 = vset.pattern.permute.xlu0 0
    %2713 = vperm.xlu0 %2712, %v2684
    %v2714 = vpop.permute.xlu0 %2713
    %2717 = vset.pattern.permute.xlu0 0
    %2718 = vperm.xlu0 %2717, %v2686
    %v2719 = vpop.permute.xlu0 %2718
    %2722 = vset.pattern.permute.xlu0 0
    %2723 = vperm.xlu0 %2722, %v2688
    %v2724 = vpop.permute.xlu0 %2723
    %2727 = vset.pattern.permute.xlu0 0
    %2728 = vperm.xlu0 %2727, %v2690
    %v2729 = vpop.permute.xlu0 %2728
    %v2731 = vmul.f32 %v2694, %v51
    %v2732 = vmul.f32 %v2694, %v52
    %v2733 = vmul.f32 %v2694, %v53
    %v2734 = vmul.f32 %v2694, %v54
    %v2735 = vmul.f32 %v2694, %v55
    %v2736 = vmul.f32 %v2694, %v56
    %v2737 = vmul.f32 %v2694, %v57
    %v2738 = vmul.f32 %v2694, %v58
    %v2739 = vmul.f32 %v2699, %v59
    %v2740 = vmul.f32 %v2699, %v60
    %v2741 = vmul.f32 %v2699, %v61
    %v2742 = vmul.f32 %v2699, %v62
    %v2743 = vmul.f32 %v2699, %v63
    %v2744 = vmul.f32 %v2699, %v64
    %v2745 = vmul.f32 %v2699, %v65
    %v2746 = vmul.f32 %v2699, %v66
    %v2747 = vmul.f32 %v2704, %v67
    %v2748 = vmul.f32 %v2704, %v68
    %v2749 = vmul.f32 %v2704, %v69
    %v2750 = vmul.f32 %v2704, %v70
    %v2751 = vmul.f32 %v2704, %v71
    %v2752 = vmul.f32 %v2704, %v72
    %v2753 = vmul.f32 %v2704, %v73
    %v2754 = vmul.f32 %v2704, %v74
    %v2755 = vmul.f32 %v2709, %v75
    %v2756 = vmul.f32 %v2709, %v76
    %v2757 = vmul.f32 %v2709, %v77
    %v2758 = vmul.f32 %v2709, %v78
    %v2759 = vmul.f32 %v2709, %v79
    %v2760 = vmul.f32 %v2709, %v80
    %v2761 = vmul.f32 %v2709, %v81
    %v2762 = vmul.f32 %v2709, %v82
    %v2763 = vmul.f32 %v2714, %v83
    %v2764 = vmul.f32 %v2714, %v84
    %v2765 = vmul.f32 %v2714, %v85
    %v2766 = vmul.f32 %v2714, %v86
    %v2767 = vmul.f32 %v2714, %v87
    %v2768 = vmul.f32 %v2714, %v88
    %v2769 = vmul.f32 %v2714, %v89
    %v2770 = vmul.f32 %v2714, %v90
    %v2771 = vmul.f32 %v2719, %v91
    %v2772 = vmul.f32 %v2719, %v92
    %v2773 = vmul.f32 %v2719, %v93
    %v2774 = vmul.f32 %v2719, %v94
    %v2775 = vmul.f32 %v2719, %v95
    %v2776 = vmul.f32 %v2719, %v96
    %v2777 = vmul.f32 %v2719, %v97
    %v2778 = vmul.f32 %v2719, %v98
    %v2779 = vmul.f32 %v2724, %v99
    %v2780 = vmul.f32 %v2724, %v100
    %v2781 = vmul.f32 %v2724, %v101
    %v2782 = vmul.f32 %v2724, %v102
    %v2783 = vmul.f32 %v2724, %v103
    %v2784 = vmul.f32 %v2724, %v104
    %v2785 = vmul.f32 %v2724, %v105
    %v2786 = vmul.f32 %v2724, %v106
    %v2787 = vmul.f32 %v2729, %v107
    %v2788 = vmul.f32 %v2729, %v108
    %v2789 = vmul.f32 %v2729, %v109
    %v2790 = vmul.f32 %v2729, %v110
    %v2791 = vmul.f32 %v2729, %v111
    %v2792 = vmul.f32 %v2729, %v112
    %v2793 = vmul.f32 %v2729, %v113
    %v2794 = vmul.f32 %v2729, %v114
    %v2795 = vrot.slane %v2731, 4
    %v2796 = vadd.f32 %v2731, %v2795
    %v2797 = vrot.slane %v2796, 2
    %v2798 = vadd.f32 %v2796, %v2797
    %v2799 = vrot.slane %v2798, 1
    %v2800 = vadd.f32 %v2798, %v2799
    %v2801 = vrot.slane %v2732, 4
    %v2802 = vadd.f32 %v2732, %v2801
    %v2803 = vrot.slane %v2802, 2
    %v2804 = vadd.f32 %v2802, %v2803
    %v2805 = vrot.slane %v2804, 1
    %v2806 = vadd.f32 %v2804, %v2805
    %v2807 = vrot.slane %v2733, 4
    %v2808 = vadd.f32 %v2733, %v2807
    %v2809 = vrot.slane %v2808, 2
    %v2810 = vadd.f32 %v2808, %v2809
    %v2811 = vrot.slane %v2810, 1
    %v2812 = vadd.f32 %v2810, %v2811
    %v2813 = vrot.slane %v2734, 4
    %v2814 = vadd.f32 %v2734, %v2813
    %v2815 = vrot.slane %v2814, 2
    %v2816 = vadd.f32 %v2814, %v2815
    %v2817 = vrot.slane %v2816, 1
    %v2818 = vadd.f32 %v2816, %v2817
    %v2819 = vrot.slane %v2735, 4
    %v2820 = vadd.f32 %v2735, %v2819
    %v2821 = vrot.slane %v2820, 2
    %v2822 = vadd.f32 %v2820, %v2821
    %v2823 = vrot.slane %v2822, 1
    %v2824 = vadd.f32 %v2822, %v2823
    %v2825 = vrot.slane %v2736, 4
    %v2826 = vadd.f32 %v2736, %v2825
    %v2827 = vrot.slane %v2826, 2
    %v2828 = vadd.f32 %v2826, %v2827
    %v2829 = vrot.slane %v2828, 1
    %v2830 = vadd.f32 %v2828, %v2829
    %v2831 = vrot.slane %v2737, 4
    %v2832 = vadd.f32 %v2737, %v2831
    %v2833 = vrot.slane %v2832, 2
    %v2834 = vadd.f32 %v2832, %v2833
    %v2835 = vrot.slane %v2834, 1
    %v2836 = vadd.f32 %v2834, %v2835
    %v2837 = vrot.slane %v2738, 4
    %v2838 = vadd.f32 %v2738, %v2837
    %v2839 = vrot.slane %v2838, 2
    %v2840 = vadd.f32 %v2838, %v2839
    %v2841 = vrot.slane %v2840, 1
    %v2842 = vadd.f32 %v2840, %v2841
    %v2843 = vrot.slane %v2739, 4
    %v2844 = vadd.f32 %v2739, %v2843
    %v2845 = vrot.slane %v2844, 2
    %v2846 = vadd.f32 %v2844, %v2845
    %v2847 = vrot.slane %v2846, 1
    %v2848 = vadd.f32 %v2846, %v2847
    %v2849 = vrot.slane %v2740, 4
    %v2850 = vadd.f32 %v2740, %v2849
    %v2851 = vrot.slane %v2850, 2
    %v2852 = vadd.f32 %v2850, %v2851
    %v2853 = vrot.slane %v2852, 1
    %v2854 = vadd.f32 %v2852, %v2853
    %v2855 = vrot.slane %v2741, 4
    %v2856 = vadd.f32 %v2741, %v2855
    %v2857 = vrot.slane %v2856, 2
    %v2858 = vadd.f32 %v2856, %v2857
    %v2859 = vrot.slane %v2858, 1
    %v2860 = vadd.f32 %v2858, %v2859
    %v2861 = vrot.slane %v2742, 4
    %v2862 = vadd.f32 %v2742, %v2861
    %v2863 = vrot.slane %v2862, 2
    %v2864 = vadd.f32 %v2862, %v2863
    %v2865 = vrot.slane %v2864, 1
    %v2866 = vadd.f32 %v2864, %v2865
    %v2867 = vrot.slane %v2743, 4
    %v2868 = vadd.f32 %v2743, %v2867
    %v2869 = vrot.slane %v2868, 2
    %v2870 = vadd.f32 %v2868, %v2869
    %v2871 = vrot.slane %v2870, 1
    %v2872 = vadd.f32 %v2870, %v2871
    %v2873 = vrot.slane %v2744, 4
    %v2874 = vadd.f32 %v2744, %v2873
    %v2875 = vrot.slane %v2874, 2
    %v2876 = vadd.f32 %v2874, %v2875
    %v2877 = vrot.slane %v2876, 1
    %v2878 = vadd.f32 %v2876, %v2877
    %v2879 = vrot.slane %v2745, 4
    %v2880 = vadd.f32 %v2745, %v2879
    %v2881 = vrot.slane %v2880, 2
    %v2882 = vadd.f32 %v2880, %v2881
    %v2883 = vrot.slane %v2882, 1
    %v2884 = vadd.f32 %v2882, %v2883
    %v2885 = vrot.slane %v2746, 4
    %v2886 = vadd.f32 %v2746, %v2885
    %v2887 = vrot.slane %v2886, 2
    %v2888 = vadd.f32 %v2886, %v2887
    %v2889 = vrot.slane %v2888, 1
    %v2890 = vadd.f32 %v2888, %v2889
    %v2891 = vrot.slane %v2747, 4
    %v2892 = vadd.f32 %v2747, %v2891
    %v2893 = vrot.slane %v2892, 2
    %v2894 = vadd.f32 %v2892, %v2893
    %v2895 = vrot.slane %v2894, 1
    %v2896 = vadd.f32 %v2894, %v2895
    %v2897 = vrot.slane %v2748, 4
    %v2898 = vadd.f32 %v2748, %v2897
    %v2899 = vrot.slane %v2898, 2
    %v2900 = vadd.f32 %v2898, %v2899
    %v2901 = vrot.slane %v2900, 1
    %v2902 = vadd.f32 %v2900, %v2901
    %v2903 = vrot.slane %v2749, 4
    %v2904 = vadd.f32 %v2749, %v2903
    %v2905 = vrot.slane %v2904, 2
    %v2906 = vadd.f32 %v2904, %v2905
    %v2907 = vrot.slane %v2906, 1
    %v2908 = vadd.f32 %v2906, %v2907
    %v2909 = vrot.slane %v2750, 4
    %v2910 = vadd.f32 %v2750, %v2909
    %v2911 = vrot.slane %v2910, 2
    %v2912 = vadd.f32 %v2910, %v2911
    %v2913 = vrot.slane %v2912, 1
    %v2914 = vadd.f32 %v2912, %v2913
    %v2915 = vrot.slane %v2751, 4
    %v2916 = vadd.f32 %v2751, %v2915
    %v2917 = vrot.slane %v2916, 2
    %v2918 = vadd.f32 %v2916, %v2917
    %v2919 = vrot.slane %v2918, 1
    %v2920 = vadd.f32 %v2918, %v2919
    %v2921 = vrot.slane %v2752, 4
    %v2922 = vadd.f32 %v2752, %v2921
    %v2923 = vrot.slane %v2922, 2
    %v2924 = vadd.f32 %v2922, %v2923
    %v2925 = vrot.slane %v2924, 1
    %v2926 = vadd.f32 %v2924, %v2925
    %v2927 = vrot.slane %v2753, 4
    %v2928 = vadd.f32 %v2753, %v2927
    %v2929 = vrot.slane %v2928, 2
    %v2930 = vadd.f32 %v2928, %v2929
    %v2931 = vrot.slane %v2930, 1
    %v2932 = vadd.f32 %v2930, %v2931
    %v2933 = vrot.slane %v2754, 4
    %v2934 = vadd.f32 %v2754, %v2933
    %v2935 = vrot.slane %v2934, 2
    %v2936 = vadd.f32 %v2934, %v2935
    %v2937 = vrot.slane %v2936, 1
    %v2938 = vadd.f32 %v2936, %v2937
    %v2939 = vrot.slane %v2755, 4
    %v2940 = vadd.f32 %v2755, %v2939
    %v2941 = vrot.slane %v2940, 2
    %v2942 = vadd.f32 %v2940, %v2941
    %v2943 = vrot.slane %v2942, 1
    %v2944 = vadd.f32 %v2942, %v2943
    %v2945 = vrot.slane %v2756, 4
    %v2946 = vadd.f32 %v2756, %v2945
    %v2947 = vrot.slane %v2946, 2
    %v2948 = vadd.f32 %v2946, %v2947
    %v2949 = vrot.slane %v2948, 1
    %v2950 = vadd.f32 %v2948, %v2949
    %v2951 = vrot.slane %v2757, 4
    %v2952 = vadd.f32 %v2757, %v2951
    %v2953 = vrot.slane %v2952, 2
    %v2954 = vadd.f32 %v2952, %v2953
    %v2955 = vrot.slane %v2954, 1
    %v2956 = vadd.f32 %v2954, %v2955
    %v2957 = vrot.slane %v2758, 4
    %v2958 = vadd.f32 %v2758, %v2957
    %v2959 = vrot.slane %v2958, 2
    %v2960 = vadd.f32 %v2958, %v2959
    %v2961 = vrot.slane %v2960, 1
    %v2962 = vadd.f32 %v2960, %v2961
    %v2963 = vrot.slane %v2759, 4
    %v2964 = vadd.f32 %v2759, %v2963
    %v2965 = vrot.slane %v2964, 2
    %v2966 = vadd.f32 %v2964, %v2965
    %v2967 = vrot.slane %v2966, 1
    %v2968 = vadd.f32 %v2966, %v2967
    %v2969 = vrot.slane %v2760, 4
    %v2970 = vadd.f32 %v2760, %v2969
    %v2971 = vrot.slane %v2970, 2
    %v2972 = vadd.f32 %v2970, %v2971
    %v2973 = vrot.slane %v2972, 1
    %v2974 = vadd.f32 %v2972, %v2973
    %v2975 = vrot.slane %v2761, 4
    %v2976 = vadd.f32 %v2761, %v2975
    %v2977 = vrot.slane %v2976, 2
    %v2978 = vadd.f32 %v2976, %v2977
    %v2979 = vrot.slane %v2978, 1
    %v2980 = vadd.f32 %v2978, %v2979
    %v2981 = vrot.slane %v2762, 4
    %v2982 = vadd.f32 %v2762, %v2981
    %v2983 = vrot.slane %v2982, 2
    %v2984 = vadd.f32 %v2982, %v2983
    %v2985 = vrot.slane %v2984, 1
    %v2986 = vadd.f32 %v2984, %v2985
    %v2987 = vrot.slane %v2763, 4
    %v2988 = vadd.f32 %v2763, %v2987
    %v2989 = vrot.slane %v2988, 2
    %v2990 = vadd.f32 %v2988, %v2989
    %v2991 = vrot.slane %v2990, 1
    %v2992 = vadd.f32 %v2990, %v2991
    %v2993 = vrot.slane %v2764, 4
    %v2994 = vadd.f32 %v2764, %v2993
    %v2995 = vrot.slane %v2994, 2
    %v2996 = vadd.f32 %v2994, %v2995
    %v2997 = vrot.slane %v2996, 1
    %v2998 = vadd.f32 %v2996, %v2997
    %v2999 = vrot.slane %v2765, 4
    %v3000 = vadd.f32 %v2765, %v2999
    %v3001 = vrot.slane %v3000, 2
    %v3002 = vadd.f32 %v3000, %v3001
    %v3003 = vrot.slane %v3002, 1
    %v3004 = vadd.f32 %v3002, %v3003
    %v3005 = vrot.slane %v2766, 4
    %v3006 = vadd.f32 %v2766, %v3005
    %v3007 = vrot.slane %v3006, 2
    %v3008 = vadd.f32 %v3006, %v3007
    %v3009 = vrot.slane %v3008, 1
    %v3010 = vadd.f32 %v3008, %v3009
    %v3011 = vrot.slane %v2767, 4
    %v3012 = vadd.f32 %v2767, %v3011
    %v3013 = vrot.slane %v3012, 2
    %v3014 = vadd.f32 %v3012, %v3013
    %v3015 = vrot.slane %v3014, 1
    %v3016 = vadd.f32 %v3014, %v3015
    %v3017 = vrot.slane %v2768, 4
    %v3018 = vadd.f32 %v2768, %v3017
    %v3019 = vrot.slane %v3018, 2
    %v3020 = vadd.f32 %v3018, %v3019
    %v3021 = vrot.slane %v3020, 1
    %v3022 = vadd.f32 %v3020, %v3021
    %v3023 = vrot.slane %v2769, 4
    %v3024 = vadd.f32 %v2769, %v3023
    %v3025 = vrot.slane %v3024, 2
    %v3026 = vadd.f32 %v3024, %v3025
    %v3027 = vrot.slane %v3026, 1
    %v3028 = vadd.f32 %v3026, %v3027
    %v3029 = vrot.slane %v2770, 4
    %v3030 = vadd.f32 %v2770, %v3029
    %v3031 = vrot.slane %v3030, 2
    %v3032 = vadd.f32 %v3030, %v3031
    %v3033 = vrot.slane %v3032, 1
    %v3034 = vadd.f32 %v3032, %v3033
    %v3035 = vrot.slane %v2771, 4
    %v3036 = vadd.f32 %v2771, %v3035
    %v3037 = vrot.slane %v3036, 2
    %v3038 = vadd.f32 %v3036, %v3037
    %v3039 = vrot.slane %v3038, 1
    %v3040 = vadd.f32 %v3038, %v3039
    %v3041 = vrot.slane %v2772, 4
    %v3042 = vadd.f32 %v2772, %v3041
    %v3043 = vrot.slane %v3042, 2
    %v3044 = vadd.f32 %v3042, %v3043
    %v3045 = vrot.slane %v3044, 1
    %v3046 = vadd.f32 %v3044, %v3045
    %v3047 = vrot.slane %v2773, 4
    %v3048 = vadd.f32 %v2773, %v3047
    %v3049 = vrot.slane %v3048, 2
    %v3050 = vadd.f32 %v3048, %v3049
    %v3051 = vrot.slane %v3050, 1
    %v3052 = vadd.f32 %v3050, %v3051
    %v3053 = vrot.slane %v2774, 4
    %v3054 = vadd.f32 %v2774, %v3053
    %v3055 = vrot.slane %v3054, 2
    %v3056 = vadd.f32 %v3054, %v3055
    %v3057 = vrot.slane %v3056, 1
    %v3058 = vadd.f32 %v3056, %v3057
    %v3059 = vrot.slane %v2775, 4
    %v3060 = vadd.f32 %v2775, %v3059
    %v3061 = vrot.slane %v3060, 2
    %v3062 = vadd.f32 %v3060, %v3061
    %v3063 = vrot.slane %v3062, 1
    %v3064 = vadd.f32 %v3062, %v3063
    %v3065 = vrot.slane %v2776, 4
    %v3066 = vadd.f32 %v2776, %v3065
    %v3067 = vrot.slane %v3066, 2
    %v3068 = vadd.f32 %v3066, %v3067
    %v3069 = vrot.slane %v3068, 1
    %v3070 = vadd.f32 %v3068, %v3069
    %v3071 = vrot.slane %v2777, 4
    %v3072 = vadd.f32 %v2777, %v3071
    %v3073 = vrot.slane %v3072, 2
    %v3074 = vadd.f32 %v3072, %v3073
    %v3075 = vrot.slane %v3074, 1
    %v3076 = vadd.f32 %v3074, %v3075
    %v3077 = vrot.slane %v2778, 4
    %v3078 = vadd.f32 %v2778, %v3077
    %v3079 = vrot.slane %v3078, 2
    %v3080 = vadd.f32 %v3078, %v3079
    %v3081 = vrot.slane %v3080, 1
    %v3082 = vadd.f32 %v3080, %v3081
    %v3083 = vrot.slane %v2779, 4
    %v3084 = vadd.f32 %v2779, %v3083
    %v3085 = vrot.slane %v3084, 2
    %v3086 = vadd.f32 %v3084, %v3085
    %v3087 = vrot.slane %v3086, 1
    %v3088 = vadd.f32 %v3086, %v3087
    %v3089 = vrot.slane %v2780, 4
    %v3090 = vadd.f32 %v2780, %v3089
    %v3091 = vrot.slane %v3090, 2
    %v3092 = vadd.f32 %v3090, %v3091
    %v3093 = vrot.slane %v3092, 1
    %v3094 = vadd.f32 %v3092, %v3093
    %v3095 = vrot.slane %v2781, 4
    %v3096 = vadd.f32 %v2781, %v3095
    %v3097 = vrot.slane %v3096, 2
    %v3098 = vadd.f32 %v3096, %v3097
    %v3099 = vrot.slane %v3098, 1
    %v3100 = vadd.f32 %v3098, %v3099
    %v3101 = vrot.slane %v2782, 4
    %v3102 = vadd.f32 %v2782, %v3101
    %v3103 = vrot.slane %v3102, 2
    %v3104 = vadd.f32 %v3102, %v3103
    %v3105 = vrot.slane %v3104, 1
    %v3106 = vadd.f32 %v3104, %v3105
    %v3107 = vrot.slane %v2783, 4
    %v3108 = vadd.f32 %v2783, %v3107
    %v3109 = vrot.slane %v3108, 2
    %v3110 = vadd.f32 %v3108, %v3109
    %v3111 = vrot.slane %v3110, 1
    %v3112 = vadd.f32 %v3110, %v3111
    %v3113 = vrot.slane %v2784, 4
    %v3114 = vadd.f32 %v2784, %v3113
    %v3115 = vrot.slane %v3114, 2
    %v3116 = vadd.f32 %v3114, %v3115
    %v3117 = vrot.slane %v3116, 1
    %v3118 = vadd.f32 %v3116, %v3117
    %v3119 = vrot.slane %v2785, 4
    %v3120 = vadd.f32 %v2785, %v3119
    %v3121 = vrot.slane %v3120, 2
    %v3122 = vadd.f32 %v3120, %v3121
    %v3123 = vrot.slane %v3122, 1
    %v3124 = vadd.f32 %v3122, %v3123
    %v3125 = vrot.slane %v2786, 4
    %v3126 = vadd.f32 %v2786, %v3125
    %v3127 = vrot.slane %v3126, 2
    %v3128 = vadd.f32 %v3126, %v3127
    %v3129 = vrot.slane %v3128, 1
    %v3130 = vadd.f32 %v3128, %v3129
    %v3131 = vrot.slane %v2787, 4
    %v3132 = vadd.f32 %v2787, %v3131
    %v3133 = vrot.slane %v3132, 2
    %v3134 = vadd.f32 %v3132, %v3133
    %v3135 = vrot.slane %v3134, 1
    %v3136 = vadd.f32 %v3134, %v3135
    %v3137 = vrot.slane %v2788, 4
    %v3138 = vadd.f32 %v2788, %v3137
    %v3139 = vrot.slane %v3138, 2
    %v3140 = vadd.f32 %v3138, %v3139
    %v3141 = vrot.slane %v3140, 1
    %v3142 = vadd.f32 %v3140, %v3141
    %v3143 = vrot.slane %v2789, 4
    %v3144 = vadd.f32 %v2789, %v3143
    %v3145 = vrot.slane %v3144, 2
    %v3146 = vadd.f32 %v3144, %v3145
    %v3147 = vrot.slane %v3146, 1
    %v3148 = vadd.f32 %v3146, %v3147
    %v3149 = vrot.slane %v2790, 4
    %v3150 = vadd.f32 %v2790, %v3149
    %v3151 = vrot.slane %v3150, 2
    %v3152 = vadd.f32 %v3150, %v3151
    %v3153 = vrot.slane %v3152, 1
    %v3154 = vadd.f32 %v3152, %v3153
    %v3155 = vrot.slane %v2791, 4
    %v3156 = vadd.f32 %v2791, %v3155
    %v3157 = vrot.slane %v3156, 2
    %v3158 = vadd.f32 %v3156, %v3157
    %v3159 = vrot.slane %v3158, 1
    %v3160 = vadd.f32 %v3158, %v3159
    %v3161 = vrot.slane %v2792, 4
    %v3162 = vadd.f32 %v2792, %v3161
    %v3163 = vrot.slane %v3162, 2
    %v3164 = vadd.f32 %v3162, %v3163
    %v3165 = vrot.slane %v3164, 1
    %v3166 = vadd.f32 %v3164, %v3165
    %v3167 = vrot.slane %v2793, 4
    %v3168 = vadd.f32 %v2793, %v3167
    %v3169 = vrot.slane %v3168, 2
    %v3170 = vadd.f32 %v3168, %v3169
    %v3171 = vrot.slane %v3170, 1
    %v3172 = vadd.f32 %v3170, %v3171
    %v3173 = vrot.slane %v2794, 4
    %v3174 = vadd.f32 %v2794, %v3173
    %v3175 = vrot.slane %v3174, 2
    %v3176 = vadd.f32 %v3174, %v3175
    %v3177 = vrot.slane %v3176, 1
    %v3178 = vadd.f32 %v3176, %v3177
    %v3243 = vsel %vm2475, %v2848, %v2800
    %v3244 = vsel %vm2477, %v2896, %v3243
    %v3245 = vsel %vm2479, %v2944, %v3244
    %v3246 = vsel %vm2481, %v2992, %v3245
    %v3247 = vsel %vm2483, %v3040, %v3246
    %v3248 = vsel %vm2485, %v3088, %v3247
    %v3249 = vsel %vm2487, %v3136, %v3248
    %v3250 = vsel %vm2475, %v2854, %v2806
    %v3251 = vsel %vm2477, %v2902, %v3250
    %v3252 = vsel %vm2479, %v2950, %v3251
    %v3253 = vsel %vm2481, %v2998, %v3252
    %v3254 = vsel %vm2483, %v3046, %v3253
    %v3255 = vsel %vm2485, %v3094, %v3254
    %v3256 = vsel %vm2487, %v3142, %v3255
    %v3257 = vsel %vm2475, %v2860, %v2812
    %v3258 = vsel %vm2477, %v2908, %v3257
    %v3259 = vsel %vm2479, %v2956, %v3258
    %v3260 = vsel %vm2481, %v3004, %v3259
    %v3261 = vsel %vm2483, %v3052, %v3260
    %v3262 = vsel %vm2485, %v3100, %v3261
    %v3263 = vsel %vm2487, %v3148, %v3262
    %v3264 = vsel %vm2475, %v2866, %v2818
    %v3265 = vsel %vm2477, %v2914, %v3264
    %v3266 = vsel %vm2479, %v2962, %v3265
    %v3267 = vsel %vm2481, %v3010, %v3266
    %v3268 = vsel %vm2483, %v3058, %v3267
    %v3269 = vsel %vm2485, %v3106, %v3268
    %v3270 = vsel %vm2487, %v3154, %v3269
    %v3271 = vsel %vm2475, %v2872, %v2824
    %v3272 = vsel %vm2477, %v2920, %v3271
    %v3273 = vsel %vm2479, %v2968, %v3272
    %v3274 = vsel %vm2481, %v3016, %v3273
    %v3275 = vsel %vm2483, %v3064, %v3274
    %v3276 = vsel %vm2485, %v3112, %v3275
    %v3277 = vsel %vm2487, %v3160, %v3276
    %v3278 = vsel %vm2475, %v2878, %v2830
    %v3279 = vsel %vm2477, %v2926, %v3278
    %v3280 = vsel %vm2479, %v2974, %v3279
    %v3281 = vsel %vm2481, %v3022, %v3280
    %v3282 = vsel %vm2483, %v3070, %v3281
    %v3283 = vsel %vm2485, %v3118, %v3282
    %v3284 = vsel %vm2487, %v3166, %v3283
    %v3285 = vsel %vm2475, %v2884, %v2836
    %v3286 = vsel %vm2477, %v2932, %v3285
    %v3287 = vsel %vm2479, %v2980, %v3286
    %v3288 = vsel %vm2481, %v3028, %v3287
    %v3289 = vsel %vm2483, %v3076, %v3288
    %v3290 = vsel %vm2485, %v3124, %v3289
    %v3291 = vsel %vm2487, %v3172, %v3290
    %v3292 = vsel %vm2475, %v2890, %v2842
    %v3293 = vsel %vm2477, %v2938, %v3292
    %v3294 = vsel %vm2479, %v2986, %v3293
    %v3295 = vsel %vm2481, %v3034, %v3294
    %v3296 = vsel %vm2483, %v3082, %v3295
    %v3297 = vsel %vm2485, %v3130, %v3296
    %v3298 = vsel %vm2487, %v3178, %v3297
    %3307 = vst [vmem:[#allocation8] sm:$0xff] %v3249
    %3308 = vst [vmem:[#allocation8 + $0x8] sm:$0xff] %v3256
    %3309 = vst [vmem:[#allocation8 + $0x10] sm:$0xff] %v3263
    %3310 = vst [vmem:[#allocation8 + $0x18] sm:$0xff] %v3270
    %3311 = vst [vmem:[#allocation8 + $0x20] sm:$0xff] %v3277
    %3312 = vst [vmem:[#allocation8 + $0x28] sm:$0xff] %v3284
    %3313 = vst [vmem:[#allocation8 + $0x30] sm:$0xff] %v3291
    %3314 = vst [vmem:[#allocation8 + $0x38] sm:$0xff] %v3298
    // Predicated region
    $region30: #{tpu_custom_call.1} parent=1 // pred_check
      _
    $region31: #{tpu_custom_call.1} parent=1 // pred_check_branch
      %3316 = sbr.rel (0) target = $region33
    $region32: #{tpu_custom_call.1} parent=1 // pred_region
      %s3318 = ssub.s32 1024, 1024
      %3319 = vsyncadd [#allocation5], %s3318
      %s3321 = sshll.u32 [#allocation8], 4
      %s3322 = int_to_ptr.vmem [resolvable:$true] %s3321
      %3324 = dma.vmem_to_hbm [thread:$0]  %s3322, 1024, %s5, [#allocation5]
    $region33: #{tpu_custom_call.1} parent=1 // pred_fallthru
      _
    // Predicated region
    $region34: #{tpu_custom_call.1} parent=1 // pred_check
      _
    $region35: #{tpu_custom_call.1} parent=1 // pred_check_branch
      %3326 = sbr.rel (0) target = $region37
    $region36: #{tpu_custom_call.1} parent=1 // pred_region
      %3327 = dma.done [#allocation5], 1024
    $region37: #{tpu_custom_call.1} parent=1 // pred_fallthru
      _
    %3328 = vsyncpa [#allocation4], 1
    %3329 = vsyncpa [#allocation7], 1
    %3330 = vsyncpa [#allocation5], 1

</llo_original>
